<compile_context>
chip_gen: v6e
topology: v6e:2x2x1
jax: 0.10.0
libtpu: 0.0.40
codegen_flags: <defaults>
</compile_context>

<pallas_src>
import jax
import jax.numpy as jnp
from jax import lax
from jax.experimental import pallas as pl
from jax.experimental.pallas import tpu as pltpu

# ---------------------- assumed module hyper-parameters ----------------------
INPUT_SIZE = 8                                  # features fed to the BiLSTM
LSTM_HIDDEN = 32                                # BiLSTM.n_hidden1
LIN_INPUT = 4                                   # Linear.input_size
LIN_HIDDEN = 32                                 # Linear.n_hidden1
N_HIDDEN1 = 2 * LSTM_HIDDEN + LIN_HIDDEN        # 96  (concat width)
N_HIDDEN2 = 128
N_HIDDEN3 = 64
LN_EPS = 1e-5

GATES = 4 * LSTM_HIDDEN                         # 128 gate lanes per direction
PRE_W = 2 * GATES + LIN_HIDDEN                  # 288 fused input-projection width


def _spec(shape):
    # full-array block resident in VMEM (grid=(1,))
    return pl.BlockSpec(shape, lambda i: (0,) * len(shape))


# --------------------------- fused forward kernel ----------------------------
def fused_regressor_kernel(x_ref, win_ref, bin_ref, whh_ref,
                           w1_ref, b1_ref, ln_g_ref, ln_b_ref,
                           w2_ref, b2_ref, w3_ref, b3_ref,
                           out_ref, state_ref,
                           pre_ref, cat_ref):
    H = LSTM_HIDDEN
    G = GATES
    Bp = state_ref.shape[1]        # padded batch (full 8-sublane tile)
    N = x_ref.shape[0]             # N = T * Bp, time-major rows (r = t*Bp + b)
    T = N // Bp

    # ---- hoisted fused input projection: ONE (N, 8) x (8, 288) MXU matmul produces
    #      [fwd gates | bwd gates | Linear(4,32) branch] with all biases folded in.
    #      Materialized into VMEM scratch so the recurrence reads cheap ref slices.
    pre_ref[...] = (jnp.dot(x_ref[...], win_ref[...],
                            preferred_element_type=jnp.float32) + bin_ref[...])

    # Linear sub-module branch (ReLU on lanes [256:288]) -> lanes [64:96] of the concat buffer.
    cat_ref[:, 2 * H:2 * H + LIN_HIDDEN] = jnp.maximum(
        pre_ref[:, 2 * G:2 * G + LIN_HIDDEN], 0.0)

    # ---- bidirectional recurrence, both directions fused into one block-diagonal matmul.
    hf = jnp.zeros((Bp, H), jnp.float32)
    cf = jnp.zeros((Bp, H), jnp.float32)
    hb = jnp.zeros((Bp, H), jnp.float32)
    cb = jnp.zeros((Bp, H), jnp.float32)
    yf = []
    yb = []

    # TODO(synk): for large / dynamic T replace the static unroll with lax.fori_loop
    # (small unroll factor) carrying (hf, cf, hb, cb) and writing per-step slabs; T=8 here.
    for t in range(T):
        tb = T - 1 - t
        # ONE recurrent MXU push for both directions: (Bp, 2H) x block-diag (2H, 2G).
        h_cat = jnp.concatenate([hf, hb], axis=-1)                              # (Bp, 64)
        g_rec = jnp.dot(h_cat, whh_ref[...],
                        preferred_element_type=jnp.float32)                     # (Bp, 256)
        pre_f = pre_ref[t * Bp:(t + 1) * Bp, 0:G]                               # static slices
        pre_b = pre_ref[tb * Bp:(tb + 1) * Bp, G:2 * G]
        g = g_rec + jnp.concatenate([pre_f, pre_b], axis=-1)                    # (Bp, 256)
        # Full-width EUP nonlinearities; some lanes of each result are discarded below
        # (bounded functions, numerically harmless) — slices pick the PyTorch i,f,g,o order.
        sg = jax.nn.sigmoid(g)
        th = jnp.tanh(g)
        cf = sg[:, H:2 * H] * cf + sg[:, 0:H] * th[:, 2 * H:3 * H]
        hf = sg[:, 3 * H:4 * H] * jnp.tanh(cf)
        cb = (sg[:, G + H:G + 2 * H] * cb
              + sg[:, G:G + H] * th[:, G + 2 * H:G + 3 * H])
        hb = sg[:, G + 3 * H:G + 4 * H] * jnp.tanh(cb)
        yf.append(hf)
        yb.append(hb)

    # Two batched stores instead of 2T masked per-step stores.
    cat_ref[:, 0:H] = jnp.concatenate(yf, axis=0)                # time-major rows, fwd lanes
    cat_ref[:, H:2 * H] = jnp.concatenate(yb[::-1], axis=0)      # reversed back to time order

    # Packed final states: [h | c] per direction, one lane-denser output.
    state_ref[0] = jnp.concatenate([hf, cf], axis=-1)
    state_ref[1] = jnp.concatenate([hb, cb], axis=-1)

    # ---- head (fused epilogue; the LSTM activation never leaves VMEM).
    # TODO(synk): Dropout(0.2) is eval-mode identity (training mask would need pltpu.prng_*).
    # TODO(synk): at production N, tile these rows over a parallel grid axis (v7x 2nd TC) and
    #             optionally cast w1/w2 to bf16 (f32 accumulation) for v6e/v7x MXU peak.
    cat = cat_ref[...]                                                           # (N, 96)
    h1 = jnp.maximum(
        jnp.dot(cat, w1_ref[...], preferred_element_type=jnp.float32) + b1_ref[...],
        0.0)                                                                     # (N, 128)
    mu = jnp.mean(h1, axis=-1, keepdims=True)
    var = jnp.mean((h1 - mu) ** 2, axis=-1, keepdims=True)
    h1n = (h1 - mu) * lax.rsqrt(var + LN_EPS) * ln_g_ref[...] + ln_b_ref[...]
    h2 = jnp.maximum(
        jnp.dot(h1n, w2_ref[...], preferred_element_type=jnp.float32) + b2_ref[...],
        0.0)                                                                     # (N, 64)
    # Lane-dense final projection: (1,64) x (64,N) -> (1,N) slab (no single-lane masked stores).
    out_ref[...] = (jnp.dot(w3_ref[...], h2.T, preferred_element_type=jnp.float32)
                    + b3_ref[...])


# ------------------------------ param packing ---------------------------------
def pack_params(params):
    """Build the fused kernel weight layout from the logical parameters."""
    lstm, head = params["lstm"], params["head"]
    H, G, F = LSTM_HIDDEN, GATES, INPUT_SIZE
    # Linear(4,32) zero-padded to use all 8 input lanes (rows 4:8 are zero).
    w_lin_pad = jnp.zeros((F, LIN_HIDDEN), jnp.float32).at[:LIN_INPUT].set(head["wl"])
    w_in = jnp.concatenate([lstm["wi_f"], lstm["wi_b"], w_lin_pad], axis=1)   # (F, 288)
    b_in = jnp.concatenate([lstm["b_f"], lstm["b_b"], head["bl"]], axis=1)    # (1, 288)
    # Block-diagonal recurrent weight: rows 0:H drive the fwd gates, rows H:2H the bwd gates.
    w_hh = jnp.zeros((2 * H, 2 * G), jnp.float32)
    w_hh = w_hh.at[0:H, 0:G].set(lstm["whh_f"]).at[H:2 * H, G:2 * G].set(lstm["whh_b"])
    return w_in, b_in, w_hh


# ------------------------------- full forward --------------------------------
def bilstm_regressor_forward(x, params):
    """x: (B, T, F) batch-first float32. Returns (output (B*T, 1), (h_n, c_n))."""
    B, T, F = x.shape
    H = LSTM_HIDDEN
    Bp = ((B + 7) // 8) * 8                      # pad batch to a full 8-sublane tile
    head = params["head"]
    w_in, b_in, w_hh = pack_params(params)

    # time-major rows (r = t*Bp + b); padded batch rows are zero and dropped in the wrapper.
    x_tm = jnp.transpose(x, (1, 0, 2))                       # (T, B, F)
    x_tm = jnp.pad(x_tm, ((0, 0), (0, Bp - B), (0, 0)))      # (T, Bp, F)
    x_tm = x_tm.reshape(T * Bp, F)

    ins = (x_tm, w_in, b_in, w_hh,
           head["w1"], head["b1"], head["ln_g"], head["ln_b"],
           head["w2"], head["b2"], head["w3"], head["b3"])
    out_shapes = (
        jax.ShapeDtypeStruct((1, T * Bp), jnp.float32),      # lane-dense per-row scalars
        jax.ShapeDtypeStruct((2, Bp, 2 * H), jnp.float32),   # packed [h | c] per direction
    )
    out_slab, state = pl.pallas_call(
        fused_regressor_kernel,
        grid=(1,),
        in_specs=[_spec(a.shape) for a in ins],
        out_specs=tuple(_spec(s.shape) for s in out_shapes),
        out_shape=out_shapes,
        scratch_shapes=[
            pltpu.VMEM((T * Bp, PRE_W), jnp.float32),        # fused input projection
            pltpu.VMEM((T * Bp, N_HIDDEN1), jnp.float32),    # concat buffer
        ],
        compiler_params=pltpu.CompilerParams(
            dimension_semantics=("arbitrary",),
            vmem_limit_bytes=64 * 1024 * 1024),
    )(*ins)

    # time-major padded slab -> batch-major (B*T, 1) to match PyTorch's .view(-1, ...) output.
    out_tm = out_slab.reshape(T, Bp, 1)[:, :B]               # (T, B, 1)
    out = jnp.transpose(out_tm, (1, 0, 2)).reshape(B * T, 1)
    h_n = state[:, :B, :H]
    c_n = state[:, :B, H:]
    return out, (h_n, c_n)


# --------------------------- deterministic params -----------------------------
def init_params(seed=42):
    keys = jax.random.split(jax.random.PRNGKey(seed), 12)
    H, F = LSTM_HIDDEN, INPUT_SIZE
    s = 0.1

    def rnd(k, shape):
        return jax.random.normal(k, shape, jnp.float32) * s

    lstm = {
        "wi_f": rnd(keys[0], (F, 4 * H)),          # W_ih forward
        "whh_f": rnd(keys[1], (H, 4 * H)),         # W_hh forward
        "b_f": rnd(keys[2], (1, 4 * H)),           # combined b_ih + b_hh forward
        "wi_b": rnd(keys[3], (F, 4 * H)),          # W_ih backward
        "whh_b": rnd(keys[4], (H, 4 * H)),         # W_hh backward
        "b_b": rnd(keys[5], (1, 4 * H)),           # combined b_ih + b_hh backward
    }
    head = {
        "wl": rnd(keys[6], (LIN_INPUT, LIN_HIDDEN)),     # Linear sub-module W
        "bl": rnd(keys[7], (1, LIN_HIDDEN)),             # Linear sub-module b
        "w1": rnd(keys[8], (N_HIDDEN1, N_HIDDEN2)),      # concat_layer Linear W
        "b1": rnd(keys[9], (1, N_HIDDEN2)),              # concat_layer Linear b
        "ln_g": jnp.ones((1, N_HIDDEN2), jnp.float32),   # LayerNorm gamma
        "ln_b": jnp.zeros((1, N_HIDDEN2), jnp.float32),  # LayerNorm beta
        "w2": rnd(keys[10], (N_HIDDEN2, N_HIDDEN3)),     # transfer Linear1 W
        "b2": jnp.zeros((1, N_HIDDEN3), jnp.float32),    # transfer Linear1 b
        "w3": jnp.transpose(rnd(keys[11], (N_HIDDEN3, 1))),  # transfer Linear2 W as (1, 64)
        "b3": jnp.zeros((1, 1), jnp.float32),            # transfer Linear2 b
    }
    return {"lstm": lstm, "head": head}


# -------------------------- pure-JAX reference (parity) -----------------------
def reference_forward(x, params):
    """XLA reference with the PyTorch BiLSTM_Regressor semantics (batch-major rows)."""
    B, T, _ = x.shape
    H = LSTM_HIDDEN
    hi = jax.lax.Precision.HIGHEST
    lstm = params["lstm"]
    head = params["head"]

    def run_dir(x_tm, wi, wh, b):
        def step(carry, xt):
            h, c = carry
            g = jnp.dot(xt, wi, precision=hi) + jnp.dot(h, wh, precision=hi) + b
            i = jax.nn.sigmoid(g[:, 0:H])
            f = jax.nn.sigmoid(g[:, H:2 * H])
            gg = jnp.tanh(g[:, 2 * H:3 * H])
            o = jax.nn.sigmoid(g[:, 3 * H:4 * H])
            c = f * c + i * gg
            h = o * jnp.tanh(c)
            return (h, c), h
        z = jnp.zeros((B, H), jnp.float32)
        (h, c), ys = lax.scan(step, (z, z), x_tm)
        return ys, h, c

    x_tm = jnp.transpose(x, (1, 0, 2))
    yf, hf, cf = run_dir(x_tm, lstm["wi_f"], lstm["whh_f"], lstm["b_f"])
    yb_rev, hb, cb = run_dir(x_tm[::-1], lstm["wi_b"], lstm["whh_b"], lstm["b_b"])
    yb = yb_rev[::-1]
    y_bm = jnp.transpose(jnp.concatenate([yf, yb], axis=-1), (1, 0, 2)).reshape(B * T, 2 * H)
    xlin = x[:, :, :LIN_INPUT].reshape(B * T, LIN_INPUT)
    lin = jnp.maximum(jnp.dot(xlin, head["wl"], precision=hi) + head["bl"], 0.0)
    cat = jnp.concatenate([y_bm, lin], axis=-1)
    h1 = jnp.maximum(jnp.dot(cat, head["w1"], precision=hi) + head["b1"], 0.0)
    mu = jnp.mean(h1, axis=-1, keepdims=True)
    var = jnp.mean((h1 - mu) ** 2, axis=-1, keepdims=True)
    h1n = (h1 - mu) * lax.rsqrt(var + LN_EPS) * head["ln_g"] + head["ln_b"]
    h2 = jnp.maximum(jnp.dot(h1n, head["w2"], precision=hi) + head["b2"], 0.0)
    out = jnp.dot(h2, jnp.transpose(head["w3"]), precision=hi) + head["b3"]
    return out, (jnp.stack([hf, hb]), jnp.stack([cf, cb]))


if __name__ == "__main__":
    B, T = 2, 8
    x = jax.random.normal(jax.random.PRNGKey(0), (B, T, INPUT_SIZE), jnp.float32)
    params = init_params()

    fwd = jax.jit(lambda xx: bilstm_regressor_forward(xx, params))
    out, (h_n, c_n) = fwd(x)
    jax.block_until_ready((out, h_n, c_n))

    assert out.shape == (B * T, 1), out.shape
    assert h_n.shape == (2, B, LSTM_HIDDEN) and c_n.shape == (2, B, LSTM_HIDDEN)
    assert bool(jnp.all(jnp.isfinite(out)))

    # numerical parity vs. the pure-JAX reference (Precision.HIGHEST); 5e-3 tolerance is the
    # intentional margin for Mosaic's default f32 MXU lowering.
    ref_out, (ref_hn, ref_cn) = jax.jit(lambda xx: reference_forward(xx, params))(x)
    assert bool(jnp.allclose(out, ref_out, rtol=5e-3, atol=5e-3)), \
        float(jnp.max(jnp.abs(out - ref_out)))
    assert bool(jnp.allclose(h_n, ref_hn, rtol=5e-3, atol=5e-3))
    assert bool(jnp.allclose(c_n, ref_cn, rtol=5e-3, atol=5e-3))
    print("KERNEL_OK")
</pallas_src>

<mosaic_0001>
module attributes {stable_mosaic.version = 11 : i64} {
  func.func @fused_regressor_kernel(%arg0: i32, %arg1: memref<64x8xf32, #tpu.memory_space<vmem>>, %arg2: memref<8x288xf32, #tpu.memory_space<vmem>>, %arg3: memref<1x288xf32, #tpu.memory_space<vmem>>, %arg4: memref<64x256xf32, #tpu.memory_space<vmem>>, %arg5: memref<96x128xf32, #tpu.memory_space<vmem>>, %arg6: memref<1x128xf32, #tpu.memory_space<vmem>>, %arg7: memref<1x128xf32, #tpu.memory_space<vmem>>, %arg8: memref<1x128xf32, #tpu.memory_space<vmem>>, %arg9: memref<128x64xf32, #tpu.memory_space<vmem>>, %arg10: memref<1x64xf32, #tpu.memory_space<vmem>>, %arg11: memref<1x64xf32, #tpu.memory_space<vmem>>, %arg12: memref<1x1xf32, #tpu.memory_space<vmem>>, %arg13: memref<1x64xf32, #tpu.memory_space<vmem>>, %arg14: memref<2x8x64xf32, #tpu.memory_space<vmem>>, %arg15: memref<64x288xf32, #tpu.memory_space<vmem>>, %arg16: memref<64x96xf32, #tpu.memory_space<vmem>>) attributes {dimension_semantics = [#tpu.dimension_semantics<arbitrary>], iteration_bounds = array<i64: 1>, scalar_prefetch = 0 : i64, scratch_operands = 2 : i64, tpu.core_type = #tpu.core_type<tc>, window_params = [{pipeline_mode = #tpu.pipeline_mode<synchronous>, transform_indices = @transform_0, window_bounds = array<i64: 64, 8>}, {pipeline_mode = #tpu.pipeline_mode<synchronous>, transform_indices = @transform_1, window_bounds = array<i64: 8, 288>}, {pipeline_mode = #tpu.pipeline_mode<synchronous>, transform_indices = @transform_2, window_bounds = array<i64: 1, 288>}, {pipeline_mode = #tpu.pipeline_mode<synchronous>, transform_indices = @transform_3, window_bounds = array<i64: 64, 256>}, {pipeline_mode = #tpu.pipeline_mode<synchronous>, transform_indices = @transform_4, window_bounds = array<i64: 96, 128>}, {pipeline_mode = #tpu.pipeline_mode<synchronous>, transform_indices = @transform_5, window_bounds = array<i64: 1, 128>}, {pipeline_mode = #tpu.pipeline_mode<synchronous>, transform_indices = @transform_6, window_bounds = array<i64: 1, 128>}, {pipeline_mode = #tpu.pipeline_mode<synchronous>, transform_indices = @transform_7, window_bounds = array<i64: 1, 128>}, {pipeline_mode = #tpu.pipeline_mode<synchronous>, transform_indices = @transform_8, window_bounds = array<i64: 128, 64>}, {pipeline_mode = #tpu.pipeline_mode<synchronous>, transform_indices = @transform_9, window_bounds = array<i64: 1, 64>}, {pipeline_mode = #tpu.pipeline_mode<synchronous>, transform_indices = @transform_10, window_bounds = array<i64: 1, 64>}, {pipeline_mode = #tpu.pipeline_mode<synchronous>, transform_indices = @transform_11, window_bounds = array<i64: 1, 1>}, {pipeline_mode = #tpu.pipeline_mode<synchronous>, transform_indices = @transform_12, window_bounds = array<i64: 1, 64>}, {pipeline_mode = #tpu.pipeline_mode<synchronous>, transform_indices = @transform_13, window_bounds = array<i64: 2, 8, 64>}]} {
    %c0 = arith.constant 0 : index
    %c0_0 = arith.constant 0 : index
    %0 = vector.load %arg1[%c0, %c0_0] : memref<64x8xf32, #tpu.memory_space<vmem>>, vector<64x8xf32>
    %c0_1 = arith.constant 0 : index
    %c0_2 = arith.constant 0 : index
    %1 = vector.load %arg2[%c0_1, %c0_2] : memref<8x288xf32, #tpu.memory_space<vmem>>, vector<8x288xf32>
    %cst = arith.constant dense<0.000000e+00> : vector<64x288xf32>
    %2 = tpu.matmul %0, %1, %cst {dimension_numbers = #tpu.dot_dimension_numbers<[1], [0], [0], [1], [0, 0, 1, 1], [], []>} : vector<64x8xf32>, vector<8x288xf32>, vector<64x288xf32> -> vector<64x288xf32>
    %c0_3 = arith.constant 0 : index
    %c0_4 = arith.constant 0 : index
    %3 = vector.load %arg3[%c0_3, %c0_4] : memref<1x288xf32, #tpu.memory_space<vmem>>, vector<1x288xf32>
    %4 = vector.broadcast %3 : vector<1x288xf32> to vector<64x288xf32>
    %5 = arith.addf %2, %4 : vector<64x288xf32>
    %c0_5 = arith.constant 0 : index
    %c0_6 = arith.constant 0 : index
    %6 = vector.load %arg15[%c0_5, %c0_6] : memref<64x288xf32, #tpu.memory_space<vmem>>, vector<64x288xf32>
    tpu.vector_store %arg15[%c0_5, %c0_6], %5 {strides = array<i32>} : memref<64x288xf32, #tpu.memory_space<vmem>>, vector<64x288xf32>,
    %c0_7 = arith.constant 0 : index
    %c256 = arith.constant 256 : index
    %7 = vector.load %arg15[%c0_7, %c256] : memref<64x288xf32, #tpu.memory_space<vmem>>, vector<64x32xf32>
    %cst_8 = arith.constant 0.000000e+00 : f32
    %8 = vector.broadcast %cst_8 : f32 to vector<64x32xf32>
    %9 = arith.maximumf %7, %8 : vector<64x32xf32>
    %c0_9 = arith.constant 0 : index
    %c64 = arith.constant 64 : index
    %10 = vector.load %arg16[%c0_9, %c64] : memref<64x96xf32, #tpu.memory_space<vmem>>, vector<64x32xf32>
    tpu.vector_store %arg16[%c0_9, %c64], %9 {strides = array<i32>} : memref<64x96xf32, #tpu.memory_space<vmem>>, vector<64x32xf32>,
    %cst_10 = arith.constant 0.000000e+00 : f32
    %11 = vector.broadcast %cst_10 : f32 to vector<8x32xf32>
    %cst_11 = arith.constant 0.000000e+00 : f32
    %12 = vector.broadcast %cst_11 : f32 to vector<8x32xf32>
    %cst_12 = arith.constant 0.000000e+00 : f32
    %13 = vector.broadcast %cst_12 : f32 to vector<8x32xf32>
    %cst_13 = arith.constant 0.000000e+00 : f32
    %14 = vector.broadcast %cst_13 : f32 to vector<8x32xf32>
    %15 = tpu.concatenate %11, %13 in 1 : vector<8x32xf32>, vector<8x32xf32> -> vector<8x64xf32>
    %c0_14 = arith.constant 0 : index
    %c0_15 = arith.constant 0 : index
    %16 = vector.load %arg4[%c0_14, %c0_15] : memref<64x256xf32, #tpu.memory_space<vmem>>, vector<64x256xf32>
    %cst_16 = arith.constant dense<0.000000e+00> : vector<8x256xf32>
    %17 = tpu.matmul %15, %16, %cst_16 {dimension_numbers = #tpu.dot_dimension_numbers<[1], [0], [0], [1], [0, 0, 1, 1], [], []>} : vector<8x64xf32>, vector<64x256xf32>, vector<8x256xf32> -> vector<8x256xf32>
    %c0_17 = arith.constant 0 : index
    %c0_18 = arith.constant 0 : index
    %18 = vector.load %arg15[%c0_17, %c0_18] : memref<64x288xf32, #tpu.memory_space<vmem>>, vector<8x128xf32>
    %c56 = arith.constant 56 : index
    %c128 = arith.constant 128 : index
    %19 = vector.load %arg15[%c56, %c128] : memref<64x288xf32, #tpu.memory_space<vmem>>, vector<8x128xf32>
    %20 = tpu.concatenate %18, %19 in 1 : vector<8x128xf32>, vector<8x128xf32> -> vector<8x256xf32>
    %21 = arith.addf %17, %20 : vector<8x256xf32>
    %22 = arith.negf %21 : vector<8x256xf32>
    %23 = math.exp %22 : vector<8x256xf32>
    %cst_19 = arith.constant 1.000000e+00 : f32
    %24 = vector.broadcast %cst_19 : f32 to vector<8x256xf32>
    %25 = arith.addf %24, %23 : vector<8x256xf32>
    %26 = arith.divf %24, %25 : vector<8x256xf32>
    %27 = math.tanh %21 : vector<8x256xf32>
    %28 = vector.extract_strided_slice %26 {offsets = [0, 32], sizes = [8, 32], strides = [1, 1]} : vector<8x256xf32> to vector<8x32xf32>
    %29 = arith.mulf %28, %12 : vector<8x32xf32>
    %30 = vector.extract_strided_slice %26 {offsets = [0, 0], sizes = [8, 32], strides = [1, 1]} : vector<8x256xf32> to vector<8x32xf32>
    %31 = vector.extract_strided_slice %27 {offsets = [0, 64], sizes = [8, 32], strides = [1, 1]} : vector<8x256xf32> to vector<8x32xf32>
    %32 = arith.mulf %30, %31 : vector<8x32xf32>
    %33 = arith.addf %29, %32 : vector<8x32xf32>
    %34 = vector.extract_strided_slice %26 {offsets = [0, 96], sizes = [8, 32], strides = [1, 1]} : vector<8x256xf32> to vector<8x32xf32>
    %35 = math.tanh %33 : vector<8x32xf32>
    %36 = arith.mulf %34, %35 : vector<8x32xf32>
    %37 = vector.extract_strided_slice %26 {offsets = [0, 160], sizes = [8, 32], strides = [1, 1]} : vector<8x256xf32> to vector<8x32xf32>
    %38 = arith.mulf %37, %14 : vector<8x32xf32>
    %39 = vector.extract_strided_slice %26 {offsets = [0, 128], sizes = [8, 32], strides = [1, 1]} : vector<8x256xf32> to vector<8x32xf32>
    %40 = vector.extract_strided_slice %27 {offsets = [0, 192], sizes = [8, 32], strides = [1, 1]} : vector<8x256xf32> to vector<8x32xf32>
    %41 = arith.mulf %39, %40 : vector<8x32xf32>
    %42 = arith.addf %38, %41 : vector<8x32xf32>
    %43 = vector.extract_strided_slice %26 {offsets = [0, 224], sizes = [8, 32], strides = [1, 1]} : vector<8x256xf32> to vector<8x32xf32>
    %44 = math.tanh %42 : vector<8x32xf32>
    %45 = arith.mulf %43, %44 : vector<8x32xf32>
    %46 = tpu.concatenate %36, %45 in 1 : vector<8x32xf32>, vector<8x32xf32> -> vector<8x64xf32>
    %c0_20 = arith.constant 0 : index
    %c0_21 = arith.constant 0 : index
    %47 = vector.load %arg4[%c0_20, %c0_21] : memref<64x256xf32, #tpu.memory_space<vmem>>, vector<64x256xf32>
    %cst_22 = arith.constant dense<0.000000e+00> : vector<8x256xf32>
    %48 = tpu.matmul %46, %47, %cst_22 {dimension_numbers = #tpu.dot_dimension_numbers<[1], [0], [0], [1], [0, 0, 1, 1], [], []>} : vector<8x64xf32>, vector<64x256xf32>, vector<8x256xf32> -> vector<8x256xf32>
    %c8 = arith.constant 8 : index
    %c0_23 = arith.constant 0 : index
    %49 = vector.load %arg15[%c8, %c0_23] : memref<64x288xf32, #tpu.memory_space<vmem>>, vector<8x128xf32>
    %c48 = arith.constant 48 : index
    %c128_24 = arith.constant 128 : index
    %50 = vector.load %arg15[%c48, %c128_24] : memref<64x288xf32, #tpu.memory_space<vmem>>, vector<8x128xf32>
    %51 = tpu.concatenate %49, %50 in 1 : vector<8x128xf32>, vector<8x128xf32> -> vector<8x256xf32>
    %52 = arith.addf %48, %51 : vector<8x256xf32>
    %53 = arith.negf %52 : vector<8x256xf32>
    %54 = math.exp %53 : vector<8x256xf32>
    %cst_25 = arith.constant 1.000000e+00 : f32
    %55 = vector.broadcast %cst_25 : f32 to vector<8x256xf32>
    %56 = arith.addf %55, %54 : vector<8x256xf32>
    %57 = arith.divf %55, %56 : vector<8x256xf32>
    %58 = math.tanh %52 : vector<8x256xf32>
    %59 = vector.extract_strided_slice %57 {offsets = [0, 32], sizes = [8, 32], strides = [1, 1]} : vector<8x256xf32> to vector<8x32xf32>
    %60 = arith.mulf %59, %33 : vector<8x32xf32>
    %61 = vector.extract_strided_slice %57 {offsets = [0, 0], sizes = [8, 32], strides = [1, 1]} : vector<8x256xf32> to vector<8x32xf32>
    %62 = vector.extract_strided_slice %58 {offsets = [0, 64], sizes = [8, 32], strides = [1, 1]} : vector<8x256xf32> to vector<8x32xf32>
    %63 = arith.mulf %61, %62 : vector<8x32xf32>
    %64 = arith.addf %60, %63 : vector<8x32xf32>
    %65 = vector.extract_strided_slice %57 {offsets = [0, 96], sizes = [8, 32], strides = [1, 1]} : vector<8x256xf32> to vector<8x32xf32>
    %66 = math.tanh %64 : vector<8x32xf32>
    %67 = arith.mulf %65, %66 : vector<8x32xf32>
    %68 = vector.extract_strided_slice %57 {offsets = [0, 160], sizes = [8, 32], strides = [1, 1]} : vector<8x256xf32> to vector<8x32xf32>
    %69 = arith.mulf %68, %42 : vector<8x32xf32>
    %70 = vector.extract_strided_slice %57 {offsets = [0, 128], sizes = [8, 32], strides = [1, 1]} : vector<8x256xf32> to vector<8x32xf32>
    %71 = vector.extract_strided_slice %58 {offsets = [0, 192], sizes = [8, 32], strides = [1, 1]} : vector<8x256xf32> to vector<8x32xf32>
    %72 = arith.mulf %70, %71 : vector<8x32xf32>
    %73 = arith.addf %69, %72 : vector<8x32xf32>
    %74 = vector.extract_strided_slice %57 {offsets = [0, 224], sizes = [8, 32], strides = [1, 1]} : vector<8x256xf32> to vector<8x32xf32>
    %75 = math.tanh %73 : vector<8x32xf32>
    %76 = arith.mulf %74, %75 : vector<8x32xf32>
    %77 = tpu.concatenate %67, %76 in 1 : vector<8x32xf32>, vector<8x32xf32> -> vector<8x64xf32>
    %c0_26 = arith.constant 0 : index
    %c0_27 = arith.constant 0 : index
    %78 = vector.load %arg4[%c0_26, %c0_27] : memref<64x256xf32, #tpu.memory_space<vmem>>, vector<64x256xf32>
    %cst_28 = arith.constant dense<0.000000e+00> : vector<8x256xf32>
    %79 = tpu.matmul %77, %78, %cst_28 {dimension_numbers = #tpu.dot_dimension_numbers<[1], [0], [0], [1], [0, 0, 1, 1], [], []>} : vector<8x64xf32>, vector<64x256xf32>, vector<8x256xf32> -> vector<8x256xf32>
    %c16 = arith.constant 16 : index
    %c0_29 = arith.constant 0 : index
    %80 = vector.load %arg15[%c16, %c0_29] : memref<64x288xf32, #tpu.memory_space<vmem>>, vector<8x128xf32>
    %c40 = arith.constant 40 : index
    %c128_30 = arith.constant 128 : index
    %81 = vector.load %arg15[%c40, %c128_30] : memref<64x288xf32, #tpu.memory_space<vmem>>, vector<8x128xf32>
    %82 = tpu.concatenate %80, %81 in 1 : vector<8x128xf32>, vector<8x128xf32> -> vector<8x256xf32>
    %83 = arith.addf %79, %82 : vector<8x256xf32>
    %84 = arith.negf %83 : vector<8x256xf32>
    %85 = math.exp %84 : vector<8x256xf32>
    %cst_31 = arith.constant 1.000000e+00 : f32
    %86 = vector.broadcast %cst_31 : f32 to vector<8x256xf32>
    %87 = arith.addf %86, %85 : vector<8x256xf32>
    %88 = arith.divf %86, %87 : vector<8x256xf32>
    %89 = math.tanh %83 : vector<8x256xf32>
    %90 = vector.extract_strided_slice %88 {offsets = [0, 32], sizes = [8, 32], strides = [1, 1]} : vector<8x256xf32> to vector<8x32xf32>
    %91 = arith.mulf %90, %64 : vector<8x32xf32>
    %92 = vector.extract_strided_slice %88 {offsets = [0, 0], sizes = [8, 32], strides = [1, 1]} : vector<8x256xf32> to vector<8x32xf32>
    %93 = vector.extract_strided_slice %89 {offsets = [0, 64], sizes = [8, 32], strides = [1, 1]} : vector<8x256xf32> to vector<8x32xf32>
    %94 = arith.mulf %92, %93 : vector<8x32xf32>
    %95 = arith.addf %91, %94 : vector<8x32xf32>
    %96 = vector.extract_strided_slice %88 {offsets = [0, 96], sizes = [8, 32], strides = [1, 1]} : vector<8x256xf32> to vector<8x32xf32>
    %97 = math.tanh %95 : vector<8x32xf32>
    %98 = arith.mulf %96, %97 : vector<8x32xf32>
    %99 = vector.extract_strided_slice %88 {offsets = [0, 160], sizes = [8, 32], strides = [1, 1]} : vector<8x256xf32> to vector<8x32xf32>
    %100 = arith.mulf %99, %73 : vector<8x32xf32>
    %101 = vector.extract_strided_slice %88 {offsets = [0, 128], sizes = [8, 32], strides = [1, 1]} : vector<8x256xf32> to vector<8x32xf32>
    %102 = vector.extract_strided_slice %89 {offsets = [0, 192], sizes = [8, 32], strides = [1, 1]} : vector<8x256xf32> to vector<8x32xf32>
    %103 = arith.mulf %101, %102 : vector<8x32xf32>
    %104 = arith.addf %100, %103 : vector<8x32xf32>
    %105 = vector.extract_strided_slice %88 {offsets = [0, 224], sizes = [8, 32], strides = [1, 1]} : vector<8x256xf32> to vector<8x32xf32>
    %106 = math.tanh %104 : vector<8x32xf32>
    %107 = arith.mulf %105, %106 : vector<8x32xf32>
    %108 = tpu.concatenate %98, %107 in 1 : vector<8x32xf32>, vector<8x32xf32> -> vector<8x64xf32>
    %c0_32 = arith.constant 0 : index
    %c0_33 = arith.constant 0 : index
    %109 = vector.load %arg4[%c0_32, %c0_33] : memref<64x256xf32, #tpu.memory_space<vmem>>, vector<64x256xf32>
    %cst_34 = arith.constant dense<0.000000e+00> : vector<8x256xf32>
    %110 = tpu.matmul %108, %109, %cst_34 {dimension_numbers = #tpu.dot_dimension_numbers<[1], [0], [0], [1], [0, 0, 1, 1], [], []>} : vector<8x64xf32>, vector<64x256xf32>, vector<8x256xf32> -> vector<8x256xf32>
    %c24 = arith.constant 24 : index
    %c0_35 = arith.constant 0 : index
    %111 = vector.load %arg15[%c24, %c0_35] : memref<64x288xf32, #tpu.memory_space<vmem>>, vector<8x128xf32>
    %c32 = arith.constant 32 : index
    %c128_36 = arith.constant 128 : index
    %112 = vector.load %arg15[%c32, %c128_36] : memref<64x288xf32, #tpu.memory_space<vmem>>, vector<8x128xf32>
    %113 = tpu.concatenate %111, %112 in 1 : vector<8x128xf32>, vector<8x128xf32> -> vector<8x256xf32>
    %114 = arith.addf %110, %113 : vector<8x256xf32>
    %115 = arith.negf %114 : vector<8x256xf32>
    %116 = math.exp %115 : vector<8x256xf32>
    %cst_37 = arith.constant 1.000000e+00 : f32
    %117 = vector.broadcast %cst_37 : f32 to vector<8x256xf32>
    %118 = arith.addf %117, %116 : vector<8x256xf32>
    %119 = arith.divf %117, %118 : vector<8x256xf32>
    %120 = math.tanh %114 : vector<8x256xf32>
    %121 = vector.extract_strided_slice %119 {offsets = [0, 32], sizes = [8, 32], strides = [1, 1]} : vector<8x256xf32> to vector<8x32xf32>
    %122 = arith.mulf %121, %95 : vector<8x32xf32>
    %123 = vector.extract_strided_slice %119 {offsets = [0, 0], sizes = [8, 32], strides = [1, 1]} : vector<8x256xf32> to vector<8x32xf32>
    %124 = vector.extract_strided_slice %120 {offsets = [0, 64], sizes = [8, 32], strides = [1, 1]} : vector<8x256xf32> to vector<8x32xf32>
    %125 = arith.mulf %123, %124 : vector<8x32xf32>
    %126 = arith.addf %122, %125 : vector<8x32xf32>
    %127 = vector.extract_strided_slice %119 {offsets = [0, 96], sizes = [8, 32], strides = [1, 1]} : vector<8x256xf32> to vector<8x32xf32>
    %128 = math.tanh %126 : vector<8x32xf32>
    %129 = arith.mulf %127, %128 : vector<8x32xf32>
    %130 = vector.extract_strided_slice %119 {offsets = [0, 160], sizes = [8, 32], strides = [1, 1]} : vector<8x256xf32> to vector<8x32xf32>
    %131 = arith.mulf %130, %104 : vector<8x32xf32>
    %132 = vector.extract_strided_slice %119 {offsets = [0, 128], sizes = [8, 32], strides = [1, 1]} : vector<8x256xf32> to vector<8x32xf32>
    %133 = vector.extract_strided_slice %120 {offsets = [0, 192], sizes = [8, 32], strides = [1, 1]} : vector<8x256xf32> to vector<8x32xf32>
    %134 = arith.mulf %132, %133 : vector<8x32xf32>
    %135 = arith.addf %131, %134 : vector<8x32xf32>
    %136 = vector.extract_strided_slice %119 {offsets = [0, 224], sizes = [8, 32], strides = [1, 1]} : vector<8x256xf32> to vector<8x32xf32>
    %137 = math.tanh %135 : vector<8x32xf32>
    %138 = arith.mulf %136, %137 : vector<8x32xf32>
    %139 = tpu.concatenate %129, %138 in 1 : vector<8x32xf32>, vector<8x32xf32> -> vector<8x64xf32>
    %c0_38 = arith.constant 0 : index
    %c0_39 = arith.constant 0 : index
    %140 = vector.load %arg4[%c0_38, %c0_39] : memref<64x256xf32, #tpu.memory_space<vmem>>, vector<64x256xf32>
    %cst_40 = arith.constant dense<0.000000e+00> : vector<8x256xf32>
    %141 = tpu.matmul %139, %140, %cst_40 {dimension_numbers = #tpu.dot_dimension_numbers<[1], [0], [0], [1], [0, 0, 1, 1], [], []>} : vector<8x64xf32>, vector<64x256xf32>, vector<8x256xf32> -> vector<8x256xf32>
    %c32_41 = arith.constant 32 : index
    %c0_42 = arith.constant 0 : index
    %142 = vector.load %arg15[%c32_41, %c0_42] : memref<64x288xf32, #tpu.memory_space<vmem>>, vector<8x128xf32>
    %c24_43 = arith.constant 24 : index
    %c128_44 = arith.constant 128 : index
    %143 = vector.load %arg15[%c24_43, %c128_44] : memref<64x288xf32, #tpu.memory_space<vmem>>, vector<8x128xf32>
    %144 = tpu.concatenate %142, %143 in 1 : vector<8x128xf32>, vector<8x128xf32> -> vector<8x256xf32>
    %145 = arith.addf %141, %144 : vector<8x256xf32>
    %146 = arith.negf %145 : vector<8x256xf32>
    %147 = math.exp %146 : vector<8x256xf32>
    %cst_45 = arith.constant 1.000000e+00 : f32
    %148 = vector.broadcast %cst_45 : f32 to vector<8x256xf32>
    %149 = arith.addf %148, %147 : vector<8x256xf32>
    %150 = arith.divf %148, %149 : vector<8x256xf32>
    %151 = math.tanh %145 : vector<8x256xf32>
    %152 = vector.extract_strided_slice %150 {offsets = [0, 32], sizes = [8, 32], strides = [1, 1]} : vector<8x256xf32> to vector<8x32xf32>
    %153 = arith.mulf %152, %126 : vector<8x32xf32>
    %154 = vector.extract_strided_slice %150 {offsets = [0, 0], sizes = [8, 32], strides = [1, 1]} : vector<8x256xf32> to vector<8x32xf32>
    %155 = vector.extract_strided_slice %151 {offsets = [0, 64], sizes = [8, 32], strides = [1, 1]} : vector<8x256xf32> to vector<8x32xf32>
    %156 = arith.mulf %154, %155 : vector<8x32xf32>
    %157 = arith.addf %153, %156 : vector<8x32xf32>
    %158 = vector.extract_strided_slice %150 {offsets = [0, 96], sizes = [8, 32], strides = [1, 1]} : vector<8x256xf32> to vector<8x32xf32>
    %159 = math.tanh %157 : vector<8x32xf32>
    %160 = arith.mulf %158, %159 : vector<8x32xf32>
    %161 = vector.extract_strided_slice %150 {offsets = [0, 160], sizes = [8, 32], strides = [1, 1]} : vector<8x256xf32> to vector<8x32xf32>
    %162 = arith.mulf %161, %135 : vector<8x32xf32>
    %163 = vector.extract_strided_slice %150 {offsets = [0, 128], sizes = [8, 32], strides = [1, 1]} : vector<8x256xf32> to vector<8x32xf32>
    %164 = vector.extract_strided_slice %151 {offsets = [0, 192], sizes = [8, 32], strides = [1, 1]} : vector<8x256xf32> to vector<8x32xf32>
    %165 = arith.mulf %163, %164 : vector<8x32xf32>
    %166 = arith.addf %162, %165 : vector<8x32xf32>
    %167 = vector.extract_strided_slice %150 {offsets = [0, 224], sizes = [8, 32], strides = [1, 1]} : vector<8x256xf32> to vector<8x32xf32>
    %168 = math.tanh %166 : vector<8x32xf32>
    %169 = arith.mulf %167, %168 : vector<8x32xf32>
    %170 = tpu.concatenate %160, %169 in 1 : vector<8x32xf32>, vector<8x32xf32> -> vector<8x64xf32>
    %c0_46 = arith.constant 0 : index
    %c0_47 = arith.constant 0 : index
    %171 = vector.load %arg4[%c0_46, %c0_47] : memref<64x256xf32, #tpu.memory_space<vmem>>, vector<64x256xf32>
    %cst_48 = arith.constant dense<0.000000e+00> : vector<8x256xf32>
    %172 = tpu.matmul %170, %171, %cst_48 {dimension_numbers = #tpu.dot_dimension_numbers<[1], [0], [0], [1], [0, 0, 1, 1], [], []>} : vector<8x64xf32>, vector<64x256xf32>, vector<8x256xf32> -> vector<8x256xf32>
    %c40_49 = arith.constant 40 : index
    %c0_50 = arith.constant 0 : index
    %173 = vector.load %arg15[%c40_49, %c0_50] : memref<64x288xf32, #tpu.memory_space<vmem>>, vector<8x128xf32>
    %c16_51 = arith.constant 16 : index
    %c128_52 = arith.constant 128 : index
    %174 = vector.load %arg15[%c16_51, %c128_52] : memref<64x288xf32, #tpu.memory_space<vmem>>, vector<8x128xf32>
    %175 = tpu.concatenate %173, %174 in 1 : vector<8x128xf32>, vector<8x128xf32> -> vector<8x256xf32>
    %176 = arith.addf %172, %175 : vector<8x256xf32>
    %177 = arith.negf %176 : vector<8x256xf32>
    %178 = math.exp %177 : vector<8x256xf32>
    %cst_53 = arith.constant 1.000000e+00 : f32
    %179 = vector.broadcast %cst_53 : f32 to vector<8x256xf32>
    %180 = arith.addf %179, %178 : vector<8x256xf32>
    %181 = arith.divf %179, %180 : vector<8x256xf32>
    %182 = math.tanh %176 : vector<8x256xf32>
    %183 = vector.extract_strided_slice %181 {offsets = [0, 32], sizes = [8, 32], strides = [1, 1]} : vector<8x256xf32> to vector<8x32xf32>
    %184 = arith.mulf %183, %157 : vector<8x32xf32>
    %185 = vector.extract_strided_slice %181 {offsets = [0, 0], sizes = [8, 32], strides = [1, 1]} : vector<8x256xf32> to vector<8x32xf32>
    %186 = vector.extract_strided_slice %182 {offsets = [0, 64], sizes = [8, 32], strides = [1, 1]} : vector<8x256xf32> to vector<8x32xf32>
    %187 = arith.mulf %185, %186 : vector<8x32xf32>
    %188 = arith.addf %184, %187 : vector<8x32xf32>
    %189 = vector.extract_strided_slice %181 {offsets = [0, 96], sizes = [8, 32], strides = [1, 1]} : vector<8x256xf32> to vector<8x32xf32>
    %190 = math.tanh %188 : vector<8x32xf32>
    %191 = arith.mulf %189, %190 : vector<8x32xf32>
    %192 = vector.extract_strided_slice %181 {offsets = [0, 160], sizes = [8, 32], strides = [1, 1]} : vector<8x256xf32> to vector<8x32xf32>
    %193 = arith.mulf %192, %166 : vector<8x32xf32>
    %194 = vector.extract_strided_slice %181 {offsets = [0, 128], sizes = [8, 32], strides = [1, 1]} : vector<8x256xf32> to vector<8x32xf32>
    %195 = vector.extract_strided_slice %182 {offsets = [0, 192], sizes = [8, 32], strides = [1, 1]} : vector<8x256xf32> to vector<8x32xf32>
    %196 = arith.mulf %194, %195 : vector<8x32xf32>
    %197 = arith.addf %193, %196 : vector<8x32xf32>
    %198 = vector.extract_strided_slice %181 {offsets = [0, 224], sizes = [8, 32], strides = [1, 1]} : vector<8x256xf32> to vector<8x32xf32>
    %199 = math.tanh %197 : vector<8x32xf32>
    %200 = arith.mulf %198, %199 : vector<8x32xf32>
    %201 = tpu.concatenate %191, %200 in 1 : vector<8x32xf32>, vector<8x32xf32> -> vector<8x64xf32>
    %c0_54 = arith.constant 0 : index
    %c0_55 = arith.constant 0 : index
    %202 = vector.load %arg4[%c0_54, %c0_55] : memref<64x256xf32, #tpu.memory_space<vmem>>, vector<64x256xf32>
    %cst_56 = arith.constant dense<0.000000e+00> : vector<8x256xf32>
    %203 = tpu.matmul %201, %202, %cst_56 {dimension_numbers = #tpu.dot_dimension_numbers<[1], [0], [0], [1], [0, 0, 1, 1], [], []>} : vector<8x64xf32>, vector<64x256xf32>, vector<8x256xf32> -> vector<8x256xf32>
    %c48_57 = arith.constant 48 : index
    %c0_58 = arith.constant 0 : index
    %204 = vector.load %arg15[%c48_57, %c0_58] : memref<64x288xf32, #tpu.memory_space<vmem>>, vector<8x128xf32>
    %c8_59 = arith.constant 8 : index
    %c128_60 = arith.constant 128 : index
    %205 = vector.load %arg15[%c8_59, %c128_60] : memref<64x288xf32, #tpu.memory_space<vmem>>, vector<8x128xf32>
    %206 = tpu.concatenate %204, %205 in 1 : vector<8x128xf32>, vector<8x128xf32> -> vector<8x256xf32>
    %207 = arith.addf %203, %206 : vector<8x256xf32>
    %208 = arith.negf %207 : vector<8x256xf32>
    %209 = math.exp %208 : vector<8x256xf32>
    %cst_61 = arith.constant 1.000000e+00 : f32
    %210 = vector.broadcast %cst_61 : f32 to vector<8x256xf32>
    %211 = arith.addf %210, %209 : vector<8x256xf32>
    %212 = arith.divf %210, %211 : vector<8x256xf32>
    %213 = math.tanh %207 : vector<8x256xf32>
    %214 = vector.extract_strided_slice %212 {offsets = [0, 32], sizes = [8, 32], strides = [1, 1]} : vector<8x256xf32> to vector<8x32xf32>
    %215 = arith.mulf %214, %188 : vector<8x32xf32>
    %216 = vector.extract_strided_slice %212 {offsets = [0, 0], sizes = [8, 32], strides = [1, 1]} : vector<8x256xf32> to vector<8x32xf32>
    %217 = vector.extract_strided_slice %213 {offsets = [0, 64], sizes = [8, 32], strides = [1, 1]} : vector<8x256xf32> to vector<8x32xf32>
    %218 = arith.mulf %216, %217 : vector<8x32xf32>
    %219 = arith.addf %215, %218 : vector<8x32xf32>
    %220 = vector.extract_strided_slice %212 {offsets = [0, 96], sizes = [8, 32], strides = [1, 1]} : vector<8x256xf32> to vector<8x32xf32>
    %221 = math.tanh %219 : vector<8x32xf32>
    %222 = arith.mulf %220, %221 : vector<8x32xf32>
    %223 = vector.extract_strided_slice %212 {offsets = [0, 160], sizes = [8, 32], strides = [1, 1]} : vector<8x256xf32> to vector<8x32xf32>
    %224 = arith.mulf %223, %197 : vector<8x32xf32>
    %225 = vector.extract_strided_slice %212 {offsets = [0, 128], sizes = [8, 32], strides = [1, 1]} : vector<8x256xf32> to vector<8x32xf32>
    %226 = vector.extract_strided_slice %213 {offsets = [0, 192], sizes = [8, 32], strides = [1, 1]} : vector<8x256xf32> to vector<8x32xf32>
    %227 = arith.mulf %225, %226 : vector<8x32xf32>
    %228 = arith.addf %224, %227 : vector<8x32xf32>
    %229 = vector.extract_strided_slice %212 {offsets = [0, 224], sizes = [8, 32], strides = [1, 1]} : vector<8x256xf32> to vector<8x32xf32>
    %230 = math.tanh %228 : vector<8x32xf32>
    %231 = arith.mulf %229, %230 : vector<8x32xf32>
    %232 = tpu.concatenate %222, %231 in 1 : vector<8x32xf32>, vector<8x32xf32> -> vector<8x64xf32>
    %c0_62 = arith.constant 0 : index
    %c0_63 = arith.constant 0 : index
    %233 = vector.load %arg4[%c0_62, %c0_63] : memref<64x256xf32, #tpu.memory_space<vmem>>, vector<64x256xf32>
    %cst_64 = arith.constant dense<0.000000e+00> : vector<8x256xf32>
    %234 = tpu.matmul %232, %233, %cst_64 {dimension_numbers = #tpu.dot_dimension_numbers<[1], [0], [0], [1], [0, 0, 1, 1], [], []>} : vector<8x64xf32>, vector<64x256xf32>, vector<8x256xf32> -> vector<8x256xf32>
    %c56_65 = arith.constant 56 : index
    %c0_66 = arith.constant 0 : index
    %235 = vector.load %arg15[%c56_65, %c0_66] : memref<64x288xf32, #tpu.memory_space<vmem>>, vector<8x128xf32>
    %c0_67 = arith.constant 0 : index
    %c128_68 = arith.constant 128 : index
    %236 = vector.load %arg15[%c0_67, %c128_68] : memref<64x288xf32, #tpu.memory_space<vmem>>, vector<8x128xf32>
    %237 = tpu.concatenate %235, %236 in 1 : vector<8x128xf32>, vector<8x128xf32> -> vector<8x256xf32>
    %238 = arith.addf %234, %237 : vector<8x256xf32>
    %239 = arith.negf %238 : vector<8x256xf32>
    %240 = math.exp %239 : vector<8x256xf32>
    %cst_69 = arith.constant 1.000000e+00 : f32
    %241 = vector.broadcast %cst_69 : f32 to vector<8x256xf32>
    %242 = arith.addf %241, %240 : vector<8x256xf32>
    %243 = arith.divf %241, %242 : vector<8x256xf32>
    %244 = math.tanh %238 : vector<8x256xf32>
    %245 = vector.extract_strided_slice %243 {offsets = [0, 32], sizes = [8, 32], strides = [1, 1]} : vector<8x256xf32> to vector<8x32xf32>
    %246 = arith.mulf %245, %219 : vector<8x32xf32>
    %247 = vector.extract_strided_slice %243 {offsets = [0, 0], sizes = [8, 32], strides = [1, 1]} : vector<8x256xf32> to vector<8x32xf32>
    %248 = vector.extract_strided_slice %244 {offsets = [0, 64], sizes = [8, 32], strides = [1, 1]} : vector<8x256xf32> to vector<8x32xf32>
    %249 = arith.mulf %247, %248 : vector<8x32xf32>
    %250 = arith.addf %246, %249 : vector<8x32xf32>
    %251 = vector.extract_strided_slice %243 {offsets = [0, 96], sizes = [8, 32], strides = [1, 1]} : vector<8x256xf32> to vector<8x32xf32>
    %252 = math.tanh %250 : vector<8x32xf32>
    %253 = arith.mulf %251, %252 : vector<8x32xf32>
    %254 = vector.extract_strided_slice %243 {offsets = [0, 160], sizes = [8, 32], strides = [1, 1]} : vector<8x256xf32> to vector<8x32xf32>
    %255 = arith.mulf %254, %228 : vector<8x32xf32>
    %256 = vector.extract_strided_slice %243 {offsets = [0, 128], sizes = [8, 32], strides = [1, 1]} : vector<8x256xf32> to vector<8x32xf32>
    %257 = vector.extract_strided_slice %244 {offsets = [0, 192], sizes = [8, 32], strides = [1, 1]} : vector<8x256xf32> to vector<8x32xf32>
    %258 = arith.mulf %256, %257 : vector<8x32xf32>
    %259 = arith.addf %255, %258 : vector<8x32xf32>
    %260 = vector.extract_strided_slice %243 {offsets = [0, 224], sizes = [8, 32], strides = [1, 1]} : vector<8x256xf32> to vector<8x32xf32>
    %261 = math.tanh %259 : vector<8x32xf32>
    %262 = arith.mulf %260, %261 : vector<8x32xf32>
    %263 = tpu.concatenate %36, %67, %98, %129, %160, %191, %222, %253 in 0 : vector<8x32xf32>, vector<8x32xf32>, vector<8x32xf32>, vector<8x32xf32>, vector<8x32xf32>, vector<8x32xf32>, vector<8x32xf32>, vector<8x32xf32> -> vector<64x32xf32>
    %c0_70 = arith.constant 0 : index
    %c0_71 = arith.constant 0 : index
    %264 = vector.load %arg16[%c0_70, %c0_71] : memref<64x96xf32, #tpu.memory_space<vmem>>, vector<64x32xf32>
    tpu.vector_store %arg16[%c0_70, %c0_71], %263 {strides = array<i32>} : memref<64x96xf32, #tpu.memory_space<vmem>>, vector<64x32xf32>,
    %265 = tpu.concatenate %262, %231, %200, %169, %138, %107, %76, %45 in 0 : vector<8x32xf32>, vector<8x32xf32>, vector<8x32xf32>, vector<8x32xf32>, vector<8x32xf32>, vector<8x32xf32>, vector<8x32xf32>, vector<8x32xf32> -> vector<64x32xf32>
    %c0_72 = arith.constant 0 : index
    %c32_73 = arith.constant 32 : index
    %266 = vector.load %arg16[%c0_72, %c32_73] : memref<64x96xf32, #tpu.memory_space<vmem>>, vector<64x32xf32>
    tpu.vector_store %arg16[%c0_72, %c32_73], %265 {strides = array<i32>} : memref<64x96xf32, #tpu.memory_space<vmem>>, vector<64x32xf32>,
    %267 = tpu.concatenate %253, %250 in 1 : vector<8x32xf32>, vector<8x32xf32> -> vector<8x64xf32>
    %c0_74 = arith.constant 0 : index
    %c0_75 = arith.constant 0 : index
    %c0_76 = arith.constant 0 : index
    %268 = vector.load %arg14[%c0_74, %c0_75, %c0_76] : memref<2x8x64xf32, #tpu.memory_space<vmem>>, vector<1x8x64xf32>
    %269 = vector.shape_cast %268 : vector<1x8x64xf32> to vector<8x64xf32>
    %270 = vector.shape_cast %267 : vector<8x64xf32> to vector<1x8x64xf32>
    tpu.vector_store %arg14[%c0_74, %c0_75, %c0_76], %270 {strides = array<i32>} : memref<2x8x64xf32, #tpu.memory_space<vmem>>, vector<1x8x64xf32>,
    %271 = tpu.concatenate %262, %259 in 1 : vector<8x32xf32>, vector<8x32xf32> -> vector<8x64xf32>
    %c1 = arith.constant 1 : index
    %c0_77 = arith.constant 0 : index
    %c0_78 = arith.constant 0 : index
    %272 = vector.load %arg14[%c1, %c0_77, %c0_78] : memref<2x8x64xf32, #tpu.memory_space<vmem>>, vector<1x8x64xf32>
    %273 = vector.shape_cast %272 : vector<1x8x64xf32> to vector<8x64xf32>
    %274 = vector.shape_cast %271 : vector<8x64xf32> to vector<1x8x64xf32>
    tpu.vector_store %arg14[%c1, %c0_77, %c0_78], %274 {strides = array<i32>} : memref<2x8x64xf32, #tpu.memory_space<vmem>>, vector<1x8x64xf32>,
    %c0_79 = arith.constant 0 : index
    %c0_80 = arith.constant 0 : index
    %275 = vector.load %arg16[%c0_79, %c0_80] : memref<64x96xf32, #tpu.memory_space<vmem>>, vector<64x96xf32>
    %c0_81 = arith.constant 0 : index
    %c0_82 = arith.constant 0 : index
    %276 = vector.load %arg5[%c0_81, %c0_82] : memref<96x128xf32, #tpu.memory_space<vmem>>, vector<96x128xf32>
    %cst_83 = arith.constant dense<0.000000e+00> : vector<64x128xf32>
    %277 = tpu.matmul %275, %276, %cst_83 {dimension_numbers = #tpu.dot_dimension_numbers<[1], [0], [0], [1], [0, 0, 1, 1], [], []>} : vector<64x96xf32>, vector<96x128xf32>, vector<64x128xf32> -> vector<64x128xf32>
    %c0_84 = arith.constant 0 : index
    %c0_85 = arith.constant 0 : index
    %278 = vector.load %arg6[%c0_84, %c0_85] : memref<1x128xf32, #tpu.memory_space<vmem>>, vector<1x128xf32>
    %279 = vector.broadcast %278 : vector<1x128xf32> to vector<64x128xf32>
    %280 = arith.addf %277, %279 : vector<64x128xf32>
    %cst_86 = arith.constant 0.000000e+00 : f32
    %281 = vector.broadcast %cst_86 : f32 to vector<64x128xf32>
    %282 = arith.maximumf %280, %281 : vector<64x128xf32>
    %cst_87 = arith.constant dense<0.000000e+00> : vector<64xf32>
    %283 = vector.multi_reduction <add>, %282, %cst_87 [1] : vector<64x128xf32> to vector<64xf32>
    %284 = vector.shape_cast %283 : vector<64xf32> to vector<64x1xf32>
    %cst_88 = arith.constant 1.280000e+02 : f32
    %285 = vector.broadcast %cst_88 : f32 to vector<64x1xf32>
    %286 = arith.divf %284, %285 : vector<64x1xf32>
    %287 = vector.broadcast %286 : vector<64x1xf32> to vector<64x128xf32>
    %288 = arith.subf %282, %287 : vector<64x128xf32>
    %289 = arith.mulf %288, %288 : vector<64x128xf32>
    %cst_89 = arith.constant dense<0.000000e+00> : vector<64xf32>
    %290 = vector.multi_reduction <add>, %289, %cst_89 [1] : vector<64x128xf32> to vector<64xf32>
    %291 = vector.shape_cast %290 : vector<64xf32> to vector<64x1xf32>
    %cst_90 = arith.constant 1.280000e+02 : f32
    %292 = vector.broadcast %cst_90 : f32 to vector<64x1xf32>
    %293 = arith.divf %291, %292 : vector<64x1xf32>
    %294 = vector.broadcast %286 : vector<64x1xf32> to vector<64x128xf32>
    %295 = arith.subf %282, %294 : vector<64x128xf32>
    %cst_91 = arith.constant 9.99999974E-6 : f32
    %296 = vector.broadcast %cst_91 : f32 to vector<64x1xf32>
    %297 = arith.addf %293, %296 : vector<64x1xf32>
    %298 = math.rsqrt %297 : vector<64x1xf32>
    %299 = vector.broadcast %298 : vector<64x1xf32> to vector<64x128xf32>
    %300 = arith.mulf %295, %299 : vector<64x128xf32>
    %c0_92 = arith.constant 0 : index
    %c0_93 = arith.constant 0 : index
    %301 = vector.load %arg7[%c0_92, %c0_93] : memref<1x128xf32, #tpu.memory_space<vmem>>, vector<1x128xf32>
    %302 = vector.broadcast %301 : vector<1x128xf32> to vector<64x128xf32>
    %303 = arith.mulf %300, %302 : vector<64x128xf32>
    %c0_94 = arith.constant 0 : index
    %c0_95 = arith.constant 0 : index
    %304 = vector.load %arg8[%c0_94, %c0_95] : memref<1x128xf32, #tpu.memory_space<vmem>>, vector<1x128xf32>
    %305 = vector.broadcast %304 : vector<1x128xf32> to vector<64x128xf32>
    %306 = arith.addf %303, %305 : vector<64x128xf32>
    %c0_96 = arith.constant 0 : index
    %c0_97 = arith.constant 0 : index
    %307 = vector.load %arg9[%c0_96, %c0_97] : memref<128x64xf32, #tpu.memory_space<vmem>>, vector<128x64xf32>
    %cst_98 = arith.constant dense<0.000000e+00> : vector<64x64xf32>
    %308 = tpu.matmul %306, %307, %cst_98 {dimension_numbers = #tpu.dot_dimension_numbers<[1], [0], [0], [1], [0, 0, 1, 1], [], []>} : vector<64x128xf32>, vector<128x64xf32>, vector<64x64xf32> -> vector<64x64xf32>
    %c0_99 = arith.constant 0 : index
    %c0_100 = arith.constant 0 : index
    %309 = vector.load %arg10[%c0_99, %c0_100] : memref<1x64xf32, #tpu.memory_space<vmem>>, vector<1x64xf32>
    %310 = vector.broadcast %309 : vector<1x64xf32> to vector<64x64xf32>
    %311 = arith.addf %308, %310 : vector<64x64xf32>
    %cst_101 = arith.constant 0.000000e+00 : f32
    %312 = vector.broadcast %cst_101 : f32 to vector<64x64xf32>
    %313 = arith.maximumf %311, %312 : vector<64x64xf32>
    %c0_102 = arith.constant 0 : index
    %c0_103 = arith.constant 0 : index
    %314 = vector.load %arg11[%c0_102, %c0_103] : memref<1x64xf32, #tpu.memory_space<vmem>>, vector<1x64xf32>
    %315 = tpu.transpose %313, [1, 0] : vector<64x64xf32> -> vector<64x64xf32>
    %cst_104 = arith.constant dense<0.000000e+00> : vector<1x64xf32>
    %316 = tpu.matmul %314, %315, %cst_104 {dimension_numbers = #tpu.dot_dimension_numbers<[1], [0], [0], [1], [0, 0, 1, 1], [], []>} : vector<1x64xf32>, vector<64x64xf32>, vector<1x64xf32> -> vector<1x64xf32>
    %c0_105 = arith.constant 0 : index
    %c0_106 = arith.constant 0 : index
    %317 = vector.load %arg12[%c0_105, %c0_106] : memref<1x1xf32, #tpu.memory_space<vmem>>, vector<1x1xf32>
    %318 = vector.broadcast %317 : vector<1x1xf32> to vector<1x64xf32>
    %319 = arith.addf %316, %318 : vector<1x64xf32>
    %c0_107 = arith.constant 0 : index
    %c0_108 = arith.constant 0 : index
    %320 = vector.load %arg13[%c0_107, %c0_108] : memref<1x64xf32, #tpu.memory_space<vmem>>, vector<1x64xf32>
    tpu.vector_store %arg13[%c0_107, %c0_108], %319 {strides = array<i32>} : memref<1x64xf32, #tpu.memory_space<vmem>>, vector<1x64xf32>,
    return
  }
  func.func @transform_0(%arg0: i32) -> (i32, i32) {
    %c0_i32 = arith.constant 0 : i32
    %c0_i32_0 = arith.constant 0 : i32
    %c0_i32_1 = arith.constant 0 : i32
    return %c0_i32, %c0_i32_0 : i32, i32
  }
  func.func @transform_1(%arg0: i32) -> (i32, i32) {
    %c0_i32 = arith.constant 0 : i32
    %c0_i32_0 = arith.constant 0 : i32
    %c0_i32_1 = arith.constant 0 : i32
    return %c0_i32, %c0_i32_0 : i32, i32
  }
  func.func @transform_2(%arg0: i32) -> (i32, i32) {
    %c0_i32 = arith.constant 0 : i32
    %c0_i32_0 = arith.constant 0 : i32
    %c0_i32_1 = arith.constant 0 : i32
    return %c0_i32, %c0_i32_0 : i32, i32
  }
  func.func @transform_3(%arg0: i32) -> (i32, i32) {
    %c0_i32 = arith.constant 0 : i32
    %c0_i32_0 = arith.constant 0 : i32
    %c0_i32_1 = arith.constant 0 : i32
    return %c0_i32, %c0_i32_0 : i32, i32
  }
  func.func @transform_4(%arg0: i32) -> (i32, i32) {
    %c0_i32 = arith.constant 0 : i32
    %c0_i32_0 = arith.constant 0 : i32
    %c0_i32_1 = arith.constant 0 : i32
    return %c0_i32, %c0_i32_0 : i32, i32
  }
  func.func @transform_5(%arg0: i32) -> (i32, i32) {
    %c0_i32 = arith.constant 0 : i32
    %c0_i32_0 = arith.constant 0 : i32
    %c0_i32_1 = arith.constant 0 : i32
    return %c0_i32, %c0_i32_0 : i32, i32
  }
  func.func @transform_6(%arg0: i32) -> (i32, i32) {
    %c0_i32 = arith.constant 0 : i32
    %c0_i32_0 = arith.constant 0 : i32
    %c0_i32_1 = arith.constant 0 : i32
    return %c0_i32, %c0_i32_0 : i32, i32
  }
  func.func @transform_7(%arg0: i32) -> (i32, i32) {
    %c0_i32 = arith.constant 0 : i32
    %c0_i32_0 = arith.constant 0 : i32
    %c0_i32_1 = arith.constant 0 : i32
    return %c0_i32, %c0_i32_0 : i32, i32
  }
  func.func @transform_8(%arg0: i32) -> (i32, i32) {
    %c0_i32 = arith.constant 0 : i32
    %c0_i32_0 = arith.constant 0 : i32
    %c0_i32_1 = arith.constant 0 : i32
    return %c0_i32, %c0_i32_0 : i32, i32
  }
  func.func @transform_9(%arg0: i32) -> (i32, i32) {
    %c0_i32 = arith.constant 0 : i32
    %c0_i32_0 = arith.constant 0 : i32
    %c0_i32_1 = arith.constant 0 : i32
    return %c0_i32, %c0_i32_0 : i32, i32
  }
  func.func @transform_10(%arg0: i32) -> (i32, i32) {
    %c0_i32 = arith.constant 0 : i32
    %c0_i32_0 = arith.constant 0 : i32
    %c0_i32_1 = arith.constant 0 : i32
    return %c0_i32, %c0_i32_0 : i32, i32
  }
  func.func @transform_11(%arg0: i32) -> (i32, i32) {
    %c0_i32 = arith.constant 0 : i32
    %c0_i32_0 = arith.constant 0 : i32
    %c0_i32_1 = arith.constant 0 : i32
    return %c0_i32, %c0_i32_0 : i32, i32
  }
  func.func @transform_12(%arg0: i32) -> (i32, i32) {
    %c0_i32 = arith.constant 0 : i32
    %c0_i32_0 = arith.constant 0 : i32
    %c0_i32_1 = arith.constant 0 : i32
    return %c0_i32, %c0_i32_0 : i32, i32
  }
  func.func @transform_13(%arg0: i32) -> (i32, i32, i32) {
    %c0_i32 = arith.constant 0 : i32
    %c0_i32_0 = arith.constant 0 : i32
    %c0_i32_1 = arith.constant 0 : i32
    %c0_i32_2 = arith.constant 0 : i32
    return %c0_i32, %c0_i32_0, %c0_i32_1 : i32, i32, i32
  }
}

</mosaic_0001>

<llo_original>
// kernel: _lambda_.1
$region0: #{_lambda_.1}
  #allocation0 [shape = 'u32[]', space=smem, size = 0x4, offset = 0x4, fixed_abs, tag = 'smem constant byte address 0x4 - core index']
  #allocation1 [shape = 'u32[144,128]{1,0:T(1,128)}', space=vmem, size = 0x12000, scoped, tag = 'internal scratch']
  #allocation2 [shape = 'f32[64,288]{1,0:T(8,128)}', space=vmem, size = 0x18000, scoped, tag = 'scratch operand']
  #allocation3 [shape = 'f32[64,96]{1,0:T(8,128)}', space=vmem, size = 0x8000, scoped, tag = 'scratch operand']
  #allocation4 [shape = 'f32[1,1]{1,0:T(1,128)S(1)}', space=vmem, size = 0x200, scoped, tag = 'scoped memory for _lambda_.1']
  %s0 = inlined_call_operand.vmem [shape: f32[64,8], index: 0, kind: input, shape index: {}]
  %s1 = inlined_call_operand.hbm [shape: f32[8,288], index: 1, kind: input, shape index: {}]
  %s2 = inlined_call_operand.vmem [shape: f32[1,288], index: 2, kind: input, shape index: {}]
  %s3 = inlined_call_operand.vmem [shape: f32[64,256], index: 3, kind: input, shape index: {}]
  %s4 = inlined_call_operand.hbm [shape: f32[96,128], index: 4, kind: input, shape index: {}]
  %s5 = inlined_call_operand.vmem [shape: f32[1,128], index: 5, kind: input, shape index: {}]
  %s6 = inlined_call_operand.vmem [shape: f32[1,128], index: 6, kind: input, shape index: {}]
  %s7 = inlined_call_operand.vmem [shape: f32[1,128], index: 7, kind: input, shape index: {}]
  %s8 = inlined_call_operand.hbm [shape: f32[128,64], index: 8, kind: input, shape index: {}]
  %s9 = inlined_call_operand.vmem [shape: f32[1,64], index: 9, kind: input, shape index: {}]
  %s10 = inlined_call_operand.vmem [shape: f32[1,64], index: 10, kind: input, shape index: {}]
  %s11 = inlined_call_operand.<no memory space> [shape: f32[1,1], index: 11, kind: input, shape index: {}]
  %s12 = inlined_call_operand.vmem [shape: f32[1,64], index: 12, kind: output, shape index: {0}]
  %s13 = inlined_call_operand.vmem [shape: f32[2,8,64], index: 13, kind: output, shape index: {1}]
  %14 = xla_tuple %s12, %s13
  %s15 = sld [smem:[#allocation0]]
  $region78: #{_lambda_.1} parent=0
    _
  %s17 = ssub.s32 1, %s15
  %s18 = scalar_select 0, %s17, %s15
  %v19 = vstv %s11
  %20 = vst [vmem:[#allocation4] sm:$0x1] %v19
  $region1: #{_lambda_.1} parent=0
    #allocation5 [shape = 'u8[12288]{0}', space=vmem, size = 0x3000, scoped, tag = 'input window, operand 1, single buffered']
    #allocation6 [shape = 's32[1]{0}', space=sflag, size = 0x4, scoped, tag = 'scoped memory for _lambda_.1']
    #allocation7 [shape = 'u8[49152]{0}', space=vmem, size = 0xc000, scoped, tag = 'input window, operand 4, single buffered']
    #allocation8 [shape = 's32[1]{0}', space=sflag, size = 0x4, scoped, tag = 'scoped memory for _lambda_.1']
    #allocation9 [shape = 'u8[65536]{0}', space=vmem, size = 0x10000, scoped, tag = 'input window, operand 8, single buffered']
    %21 = vsyncpa [#allocation6], 0
    %22 = vsyncpa [#allocation8], 0
    // Predicated region
    $region2: #{_lambda_.1} parent=1 // pred_check
      _
    $region3: #{_lambda_.1} parent=1 // pred_check_branch
      %24 = sbr.rel (0) target = $region5
    $region4: #{_lambda_.1} parent=1 // pred_region
      _
    $region5: #{_lambda_.1} parent=1 // pred_fallthru
      _
    // Predicated region
    $region6: #{_lambda_.1} parent=1 // pred_check
      _
    $region7: #{_lambda_.1} parent=1 // pred_check_branch
      %26 = sbr.rel (0) target = $region9
    $region8: #{_lambda_.1} parent=1 // pred_region
      %s28 = ssub.s32 384, 384
      %29 = vsyncadd [#allocation6], %s28
      %s31 = sshll.u32 [#allocation5], 4
      %s32 = int_to_ptr.vmem [resolvable:$true] %s31
      %34 = dma.hbm_to_vmem [thread:$0]  %s1, 384, %s32, [#allocation6]
    $region9: #{_lambda_.1} parent=1 // pred_fallthru
      _
    // Predicated region
    $region10: #{_lambda_.1} parent=1 // pred_check
      _
    $region11: #{_lambda_.1} parent=1 // pred_check_branch
      %36 = sbr.rel (0) target = $region13
    $region12: #{_lambda_.1} parent=1 // pred_region
      _
    $region13: #{_lambda_.1} parent=1 // pred_fallthru
      _
    // Predicated region
    $region14: #{_lambda_.1} parent=1 // pred_check
      _
    $region15: #{_lambda_.1} parent=1 // pred_check_branch
      %38 = sbr.rel (0) target = $region17
    $region16: #{_lambda_.1} parent=1 // pred_region
      _
    $region17: #{_lambda_.1} parent=1 // pred_fallthru
      _
    // Predicated region
    $region18: #{_lambda_.1} parent=1 // pred_check
      _
    $region19: #{_lambda_.1} parent=1 // pred_check_branch
      %40 = sbr.rel (0) target = $region21
    $region20: #{_lambda_.1} parent=1 // pred_region
      %s42 = ssub.s32 1536, 1536
      %43 = vsyncadd [#allocation8], %s42
      %s44 = sshll.u32 [#allocation7], 4
      %s45 = int_to_ptr.vmem [resolvable:$true] %s44
      %50 = dma.hbm_to_vmem [thread:$0]  %s4, 1536, %s45, [#allocation8], 128, 128, 8
    $region21: #{_lambda_.1} parent=1 // pred_fallthru
      _
    // Predicated region
    $region22: #{_lambda_.1} parent=1 // pred_check
      _
    $region23: #{_lambda_.1} parent=1 // pred_check_branch
      %52 = sbr.rel (0) target = $region25
    $region24: #{_lambda_.1} parent=1 // pred_region
      _
    $region25: #{_lambda_.1} parent=1 // pred_fallthru
      _
    // Predicated region
    $region26: #{_lambda_.1} parent=1 // pred_check
      _
    $region27: #{_lambda_.1} parent=1 // pred_check_branch
      %54 = sbr.rel (0) target = $region29
    $region28: #{_lambda_.1} parent=1 // pred_region
      _
    $region29: #{_lambda_.1} parent=1 // pred_fallthru
      _
    // Predicated region
    $region30: #{_lambda_.1} parent=1 // pred_check
      _
    $region31: #{_lambda_.1} parent=1 // pred_check_branch
      %56 = sbr.rel (0) target = $region33
    $region32: #{_lambda_.1} parent=1 // pred_region
      _
    $region33: #{_lambda_.1} parent=1 // pred_fallthru
      _
    // Predicated region
    $region34: #{_lambda_.1} parent=1 // pred_check
      _
    $region35: #{_lambda_.1} parent=1 // pred_check_branch
      %58 = sbr.rel (0) target = $region37
    $region36: #{_lambda_.1} parent=1 // pred_region
      %s60 = ssub.s32 2048, 2048
      %61 = vsyncadd [#allocation8], %s60
      %s62 = sshll.u32 [#allocation9], 4
      %s63 = int_to_ptr.vmem [resolvable:$true] %s62
      %68 = dma.hbm_to_vmem [thread:$0]  %s8, 2048, %s63, [#allocation8], 128, 128, 8
    $region37: #{_lambda_.1} parent=1 // pred_fallthru
      _
    // Predicated region
    $region38: #{_lambda_.1} parent=1 // pred_check
      _
    $region39: #{_lambda_.1} parent=1 // pred_check_branch
      %70 = sbr.rel (0) target = $region41
    $region40: #{_lambda_.1} parent=1 // pred_region
      _
    $region41: #{_lambda_.1} parent=1 // pred_fallthru
      _
    // Predicated region
    $region42: #{_lambda_.1} parent=1 // pred_check
      _
    $region43: #{_lambda_.1} parent=1 // pred_check_branch
      %72 = sbr.rel (0) target = $region45
    $region44: #{_lambda_.1} parent=1 // pred_region
      _
    $region45: #{_lambda_.1} parent=1 // pred_fallthru
      _
    // Predicated region
    $region46: #{_lambda_.1} parent=1 // pred_check
      _
    $region47: #{_lambda_.1} parent=1 // pred_check_branch
      %74 = sbr.rel (0) target = $region49
    $region48: #{_lambda_.1} parent=1 // pred_region
      _
    $region49: #{_lambda_.1} parent=1 // pred_fallthru
      _
    // Predicated region
    $region50: #{_lambda_.1} parent=1 // pred_check
      _
    $region51: #{_lambda_.1} parent=1 // pred_check_branch
      %76 = sbr.rel (0) target = $region53
    $region52: #{_lambda_.1} parent=1 // pred_region
      %77 = dma.done [#allocation6], 384
    $region53: #{_lambda_.1} parent=1 // pred_fallthru
      _
    // Predicated region
    $region54: #{_lambda_.1} parent=1 // pred_check
      _
    $region55: #{_lambda_.1} parent=1 // pred_check_branch
      %79 = sbr.rel (0) target = $region57
    $region56: #{_lambda_.1} parent=1 // pred_region
      %80 = dma.done [#allocation8], 1536
    $region57: #{_lambda_.1} parent=1 // pred_fallthru
      _
    // Predicated region
    $region58: #{_lambda_.1} parent=1 // pred_check
      _
    $region59: #{_lambda_.1} parent=1 // pred_check_branch
      %82 = sbr.rel (0) target = $region61
    $region60: #{_lambda_.1} parent=1 // pred_region
      %83 = dma.done [#allocation8], 2048
    $region61: #{_lambda_.1} parent=1 // pred_fallthru
      _
    %v84 = vld [vmem:[%s0] sm:$0xff]
    %v85 = vld [vmem:[%s0 + $0x8] sm:$0xff]
    %v86 = vld [vmem:[%s0 + $0x10] sm:$0xff]
    %v87 = vld [vmem:[%s0 + $0x18] sm:$0xff]
    %v88 = vld [vmem:[%s0 + $0x20] sm:$0xff]
    %v89 = vld [vmem:[%s0 + $0x28] sm:$0xff]
    %v90 = vld [vmem:[%s0 + $0x30] sm:$0xff]
    %v91 = vld [vmem:[%s0 + $0x38] sm:$0xff]
    %v92 = vld [vmem:[#allocation5] sm:$0xff]
    %v93 = vld [vmem:[#allocation5 + $0x8] sm:$0xff]
    %v94 = vld [vmem:[#allocation5 + $0x10] sm:$0xff]
    %v95 = vld [vmem:[%s2] sm:$0x7]
    %v97 = vlaneseq
    %v98 = vshrl.u32 %v97, 7
    %v99 = vsub.s32 0, %v98
    %v100 = vrot.slane %v95, %v99
    %v101 = vlaneseq
    %v102 = vshrl.u32 %v101, 7
    %v103 = vsub.s32 1, %v102
    %v104 = vrot.slane %v95, %v103
    %v105 = vlaneseq
    %v106 = vshrl.u32 %v105, 7
    %v107 = vsub.s32 2, %v106
    %v108 = vrot.slane %v95, %v107
    %vm112 = vcmask 64512
    %v114 = vsel %vm112, %v84, 0
    %v117 = vsel %vm112, %v85, 0
    %v120 = vsel %vm112, %v86, 0
    %v123 = vsel %vm112, %v87, 0
    %v126 = vsel %vm112, %v88, 0
    %v129 = vsel %vm112, %v89, 0
    %v132 = vsel %vm112, %v90, 0
    %v135 = vsel %vm112, %v91, 0
    %137 = vmatprep.subr.mxu0 0.0
    %138 = vmatpush1.msra.mxu0 0.0
    %139 = vmatprep.subr.mxu0 0.0
    %140 = vmatpush1.msra.mxu0 0.0
    %141 = vmatprep.subr.mxu0 0.0
    %142 = vmatpush1.msra.mxu0 0.0
    %143 = vmatprep.subr.mxu0 0.0
    %144 = vmatpush1.msra.mxu0 0.0
    %145 = vmatprep.subr.mxu0 0.0
    %146 = vmatpush1.msra.mxu0 0.0
    %147 = vmatprep.subr.mxu0 0.0
    %148 = vmatpush1.msra.mxu0 0.0
    %149 = vmatprep.subr.mxu0 0.0
    %150 = vmatpush1.msra.mxu0 0.0
    %151 = vmatprep.subr.mxu0 0.0
    %152 = vmatpush1.msra.mxu0 0.0
    %153 = vmatprep.subr.mxu0 0.0
    %154 = vmatpush1.msra.mxu0 0.0
    %155 = vmatprep.subr.mxu0 0.0
    %156 = vmatpush1.msra.mxu0 0.0
    %157 = vmatprep.subr.mxu0 0.0
    %158 = vmatpush1.msra.mxu0 0.0
    %159 = vmatprep.subr.mxu0 0.0
    %160 = vmatpush1.msra.mxu0 0.0
    %161 = vmatprep.subr.mxu0 0.0
    %162 = vmatpush1.msra.mxu0 0.0
    %163 = vmatprep.subr.mxu0 0.0
    %164 = vmatpush1.msra.mxu0 0.0
    %165 = vmatprep.subr.mxu0 0.0
    %166 = vmatpush1.msra.mxu0 0.0
    %167 = vmatprep.subr.mxu0 %v93
    %168 = vmatpush1.msra.mxu0 %v92
    %169 = vmatprep.subr.mxu0 0.0
    %170 = vmatpush2.msra.mxu0 0.0
    %171 = vmatprep.subr.mxu0 0.0
    %172 = vmatpush2.msra.mxu0 0.0
    %173 = vmatprep.subr.mxu0 0.0
    %174 = vmatpush2.msra.mxu0 0.0
    %175 = vmatprep.subr.mxu0 0.0
    %176 = vmatpush2.msra.mxu0 0.0
    %177 = vmatprep.subr.mxu0 0.0
    %178 = vmatpush2.msra.mxu0 0.0
    %179 = vmatprep.subr.mxu0 0.0
    %180 = vmatpush2.msra.mxu0 0.0
    %181 = vmatprep.subr.mxu0 0.0
    %182 = vmatpush2.msra.mxu0 0.0
    %183 = vmatprep.subr.mxu0 0.0
    %184 = vmatpush2.msra.mxu0 0.0
    %185 = vmatprep.subr.mxu0 0.0
    %186 = vmatpush2.msra.mxu0 0.0
    %187 = vmatprep.subr.mxu0 0.0
    %188 = vmatpush2.msra.mxu0 0.0
    %189 = vmatprep.subr.mxu0 0.0
    %190 = vmatpush2.msra.mxu0 0.0
    %191 = vmatprep.subr.mxu0 0.0
    %192 = vmatpush2.msra.mxu0 0.0
    %193 = vmatprep.subr.mxu0 0.0
    %194 = vmatpush2.msra.mxu0 0.0
    %195 = vmatprep.subr.mxu0 0.0
    %196 = vmatpush2.msra.mxu0 0.0
    %197 = vmatprep.subr.mxu0 0.0
    %198 = vmatpush2.msra.mxu0 0.0
    %199 = vmatprep.subr.mxu0 0.0
    %200 = vmatpush2.msra.mxu0 0.0
    %201 = vmatprep.mubr.f32.mxu0 0.0
    %202 = vmatmul.mubr.f32.gmra.mxu0 %v114
    %v203 = vpop.f32.mrf.mxu0
    %v204 = vadd.f32 %v100, %v203
    %v205 = vpop.f32.mrf.mxu0
    %v206 = vadd.f32 %v104, %v205
    %207 = vmatprep.mubr.f32.mxu0 0.0
    %208 = vmatmul.mubr.f32.gmra.mxu0 %v117
    %v209 = vpop.f32.mrf.mxu0
    %v210 = vadd.f32 %v100, %v209
    %v211 = vpop.f32.mrf.mxu0
    %v212 = vadd.f32 %v104, %v211
    %213 = vmatprep.mubr.f32.mxu0 0.0
    %214 = vmatmul.mubr.f32.gmra.mxu0 %v120
    %v215 = vpop.f32.mrf.mxu0
    %v216 = vadd.f32 %v100, %v215
    %v217 = vpop.f32.mrf.mxu0
    %v218 = vadd.f32 %v104, %v217
    %219 = vmatprep.mubr.f32.mxu0 0.0
    %220 = vmatmul.mubr.f32.gmra.mxu0 %v123
    %v221 = vpop.f32.mrf.mxu0
    %v222 = vadd.f32 %v100, %v221
    %v223 = vpop.f32.mrf.mxu0
    %v224 = vadd.f32 %v104, %v223
    %225 = vmatprep.mubr.f32.mxu0 0.0
    %226 = vmatmul.mubr.f32.gmra.mxu0 %v126
    %v227 = vpop.f32.mrf.mxu0
    %v228 = vadd.f32 %v100, %v227
    %v229 = vpop.f32.mrf.mxu0
    %v230 = vadd.f32 %v104, %v229
    %231 = vmatprep.mubr.f32.mxu0 0.0
    %232 = vmatmul.mubr.f32.gmra.mxu0 %v129
    %v233 = vpop.f32.mrf.mxu0
    %v234 = vadd.f32 %v100, %v233
    %v235 = vpop.f32.mrf.mxu0
    %v236 = vadd.f32 %v104, %v235
    %237 = vmatprep.mubr.f32.mxu0 0.0
    %238 = vmatmul.mubr.f32.gmra.mxu0 %v132
    %v239 = vpop.f32.mrf.mxu0
    %v240 = vadd.f32 %v100, %v239
    %v241 = vpop.f32.mrf.mxu0
    %v242 = vadd.f32 %v104, %v241
    %243 = vmatprep.mubr.f32.mxu0 0.0
    %244 = vmatmul.mubr.f32.gmra.mxu0 %v135
    %v245 = vpop.f32.mrf.mxu0
    %v246 = vadd.f32 %v100, %v245
    %v247 = vpop.f32.mrf.mxu0
    %v248 = vadd.f32 %v104, %v247
    %249 = vdwg.mxu0
    %250 = vmatprep.subr.mxu0 0.0
    %251 = vmatpush1.msra.mxu0 0.0
    %252 = vmatprep.subr.mxu0 0.0
    %253 = vmatpush1.msra.mxu0 0.0
    %254 = vmatprep.subr.mxu0 0.0
    %255 = vmatpush1.msra.mxu0 0.0
    %256 = vmatprep.subr.mxu0 0.0
    %257 = vmatpush1.msra.mxu0 0.0
    %258 = vmatprep.subr.mxu0 0.0
    %259 = vmatpush1.msra.mxu0 0.0
    %260 = vmatprep.subr.mxu0 0.0
    %261 = vmatpush1.msra.mxu0 0.0
    %262 = vmatprep.subr.mxu0 0.0
    %263 = vmatpush1.msra.mxu0 0.0
    %264 = vmatprep.subr.mxu0 0.0
    %265 = vmatpush1.msra.mxu0 0.0
    %266 = vmatprep.subr.mxu0 0.0
    %267 = vmatpush1.msra.mxu0 0.0
    %268 = vmatprep.subr.mxu0 0.0
    %269 = vmatpush1.msra.mxu0 0.0
    %270 = vmatprep.subr.mxu0 0.0
    %271 = vmatpush1.msra.mxu0 0.0
    %272 = vmatprep.subr.mxu0 0.0
    %273 = vmatpush1.msra.mxu0 0.0
    %274 = vmatprep.subr.mxu0 0.0
    %275 = vmatpush1.msra.mxu0 0.0
    %276 = vmatprep.subr.mxu0 0.0
    %277 = vmatpush1.msra.mxu0 0.0
    %278 = vmatprep.subr.mxu0 0.0
    %279 = vmatpush1.msra.mxu0 0.0
    %280 = vmatprep.subr.mxu0 0.0
    %281 = vmatpush1.msra.mxu0 %v94
    %282 = vmatprep.subr.mxu0 0.0
    %283 = vmatpush2.msra.mxu0 0.0
    %284 = vmatprep.subr.mxu0 0.0
    %285 = vmatpush2.msra.mxu0 0.0
    %286 = vmatprep.subr.mxu0 0.0
    %287 = vmatpush2.msra.mxu0 0.0
    %288 = vmatprep.subr.mxu0 0.0
    %289 = vmatpush2.msra.mxu0 0.0
    %290 = vmatprep.subr.mxu0 0.0
    %291 = vmatpush2.msra.mxu0 0.0
    %292 = vmatprep.subr.mxu0 0.0
    %293 = vmatpush2.msra.mxu0 0.0
    %294 = vmatprep.subr.mxu0 0.0
    %295 = vmatpush2.msra.mxu0 0.0
    %296 = vmatprep.subr.mxu0 0.0
    %297 = vmatpush2.msra.mxu0 0.0
    %298 = vmatprep.subr.mxu0 0.0
    %299 = vmatpush2.msra.mxu0 0.0
    %300 = vmatprep.subr.mxu0 0.0
    %301 = vmatpush2.msra.mxu0 0.0
    %302 = vmatprep.subr.mxu0 0.0
    %303 = vmatpush2.msra.mxu0 0.0
    %304 = vmatprep.subr.mxu0 0.0
    %305 = vmatpush2.msra.mxu0 0.0
    %306 = vmatprep.subr.mxu0 0.0
    %307 = vmatpush2.msra.mxu0 0.0
    %308 = vmatprep.subr.mxu0 0.0
    %309 = vmatpush2.msra.mxu0 0.0
    %310 = vmatprep.subr.mxu0 0.0
    %311 = vmatpush2.msra.mxu0 0.0
    %312 = vmatprep.subr.mxu0 0.0
    %313 = vmatpush2.msra.mxu0 0.0
    %314 = vmatprep.mubr.f32.mxu0 0.0
    %315 = vmatmul.mubr.f32.gmra.mxu0 %v114
    %v316 = vpop.f32.mrf.mxu0
    %v317 = vadd.f32 %v108, %v316
    %v318 = vpop.f32.mrf.mxu0
    %319 = vmatprep.mubr.f32.mxu0 0.0
    %320 = vmatmul.mubr.f32.gmra.mxu0 %v117
    %v321 = vpop.f32.mrf.mxu0
    %v322 = vadd.f32 %v108, %v321
    %v323 = vpop.f32.mrf.mxu0
    %324 = vmatprep.mubr.f32.mxu0 0.0
    %325 = vmatmul.mubr.f32.gmra.mxu0 %v120
    %v326 = vpop.f32.mrf.mxu0
    %v327 = vadd.f32 %v108, %v326
    %v328 = vpop.f32.mrf.mxu0
    %329 = vmatprep.mubr.f32.mxu0 0.0
    %330 = vmatmul.mubr.f32.gmra.mxu0 %v123
    %v331 = vpop.f32.mrf.mxu0
    %v332 = vadd.f32 %v108, %v331
    %v333 = vpop.f32.mrf.mxu0
    %334 = vmatprep.mubr.f32.mxu0 0.0
    %335 = vmatmul.mubr.f32.gmra.mxu0 %v126
    %v336 = vpop.f32.mrf.mxu0
    %v337 = vadd.f32 %v108, %v336
    %v338 = vpop.f32.mrf.mxu0
    %339 = vmatprep.mubr.f32.mxu0 0.0
    %340 = vmatmul.mubr.f32.gmra.mxu0 %v129
    %v341 = vpop.f32.mrf.mxu0
    %v342 = vadd.f32 %v108, %v341
    %v343 = vpop.f32.mrf.mxu0
    %344 = vmatprep.mubr.f32.mxu0 0.0
    %345 = vmatmul.mubr.f32.gmra.mxu0 %v132
    %v346 = vpop.f32.mrf.mxu0
    %v347 = vadd.f32 %v108, %v346
    %v348 = vpop.f32.mrf.mxu0
    %349 = vmatprep.mubr.f32.mxu0 0.0
    %350 = vmatmul.mubr.f32.gmra.mxu0 %v135
    %v351 = vpop.f32.mrf.mxu0
    %v352 = vadd.f32 %v108, %v351
    %v353 = vpop.f32.mrf.mxu0
    %354 = vdwg.mxu0
    %355 = vst [vmem:[#allocation2] sm:$0xff] %v204
    %356 = vst [vmem:[#allocation2 + $0x8] sm:$0xff] %v206
    %vm357 = vcmask 261120
    %358 = vst.msk [vmem:[#allocation2 + $0x10] sm:$0xff] %vm357, %v317
    %359 = vst [vmem:[#allocation2 + $0x18] sm:$0xff] %v210
    %360 = vst [vmem:[#allocation2 + $0x20] sm:$0xff] %v212
    %361 = vst.msk [vmem:[#allocation2 + $0x28] sm:$0xff] %vm357, %v322
    %362 = vst [vmem:[#allocation2 + $0x30] sm:$0xff] %v216
    %363 = vst [vmem:[#allocation2 + $0x38] sm:$0xff] %v218
    %364 = vst.msk [vmem:[#allocation2 + $0x40] sm:$0xff] %vm357, %v327
    %365 = vst [vmem:[#allocation2 + $0x48] sm:$0xff] %v222
    %366 = vst [vmem:[#allocation2 + $0x50] sm:$0xff] %v224
    %367 = vst.msk [vmem:[#allocation2 + $0x58] sm:$0xff] %vm357, %v332
    %368 = vst [vmem:[#allocation2 + $0x60] sm:$0xff] %v228
    %369 = vst [vmem:[#allocation2 + $0x68] sm:$0xff] %v230
    %370 = vst.msk [vmem:[#allocation2 + $0x70] sm:$0xff] %vm357, %v337
    %371 = vst [vmem:[#allocation2 + $0x78] sm:$0xff] %v234
    %372 = vst [vmem:[#allocation2 + $0x80] sm:$0xff] %v236
    %373 = vst.msk [vmem:[#allocation2 + $0x88] sm:$0xff] %vm357, %v342
    %374 = vst [vmem:[#allocation2 + $0x90] sm:$0xff] %v240
    %375 = vst [vmem:[#allocation2 + $0x98] sm:$0xff] %v242
    %376 = vst.msk [vmem:[#allocation2 + $0xa0] sm:$0xff] %vm357, %v347
    %377 = vst [vmem:[#allocation2 + $0xa8] sm:$0xff] %v246
    %378 = vst [vmem:[#allocation2 + $0xb0] sm:$0xff] %v248
    %379 = vst.msk [vmem:[#allocation2 + $0xb8] sm:$0xff] %vm357, %v352
    %v380 = vld [vmem:[#allocation2 + $0x10] sm:$0xff]
    %v381 = vld [vmem:[#allocation2 + $0x28] sm:$0xff]
    %v382 = vld [vmem:[#allocation2 + $0x40] sm:$0xff]
    %v383 = vld [vmem:[#allocation2 + $0x58] sm:$0xff]
    %v384 = vld [vmem:[#allocation2 + $0x70] sm:$0xff]
    %v385 = vld [vmem:[#allocation2 + $0x88] sm:$0xff]
    %v386 = vld [vmem:[#allocation2 + $0xa0] sm:$0xff]
    %v387 = vld [vmem:[#allocation2 + $0xb8] sm:$0xff]
    %v388 = vmax.f32 %v380, 0.0
    %v389 = vmax.f32 %v381, 0.0
    %v390 = vmax.f32 %v382, 0.0
    %v391 = vmax.f32 %v383, 0.0
    %v392 = vmax.f32 %v384, 0.0
    %v393 = vmax.f32 %v385, 0.0
    %v394 = vmax.f32 %v386, 0.0
    %v395 = vmax.f32 %v387, 0.0
    %404 = vrot.lane.b32.xlu0 %v388, 64
    %v405 = vpop.permute.xlu0 %404
    %406 = vrot.lane.b32.xlu0 %v389, 64
    %v407 = vpop.permute.xlu0 %406
    %408 = vrot.lane.b32.xlu0 %v390, 64
    %v409 = vpop.permute.xlu0 %408
    %410 = vrot.lane.b32.xlu0 %v391, 64
    %v411 = vpop.permute.xlu0 %410
    %412 = vrot.lane.b32.xlu0 %v392, 64
    %v413 = vpop.permute.xlu0 %412
    %414 = vrot.lane.b32.xlu0 %v393, 64
    %v415 = vpop.permute.xlu0 %414
    %416 = vrot.lane.b32.xlu0 %v394, 64
    %v417 = vpop.permute.xlu0 %416
    %418 = vrot.lane.b32.xlu0 %v395, 64
    %v419 = vpop.permute.xlu0 %418
    %vm428 = vcmask 785920
    %429 = vst.msk [vmem:[#allocation3] sm:$0xff] %vm428, %v405
    %430 = vst.msk [vmem:[#allocation3 + $0x8] sm:$0xff] %vm428, %v407
    %431 = vst.msk [vmem:[#allocation3 + $0x10] sm:$0xff] %vm428, %v409
    %432 = vst.msk [vmem:[#allocation3 + $0x18] sm:$0xff] %vm428, %v411
    %433 = vst.msk [vmem:[#allocation3 + $0x20] sm:$0xff] %vm428, %v413
    %434 = vst.msk [vmem:[#allocation3 + $0x28] sm:$0xff] %vm428, %v415
    %435 = vst.msk [vmem:[#allocation3 + $0x30] sm:$0xff] %vm428, %v417
    %436 = vst.msk [vmem:[#allocation3 + $0x38] sm:$0xff] %vm428, %v419
    %v437 = vld [vmem:[%s3] sm:$0xff]
    %v438 = vld [vmem:[%s3 + $0x8] sm:$0xff]
    %v439 = vld [vmem:[%s3 + $0x10] sm:$0xff]
    %v440 = vld [vmem:[%s3 + $0x18] sm:$0xff]
    %v441 = vld [vmem:[%s3 + $0x20] sm:$0xff]
    %v442 = vld [vmem:[%s3 + $0x28] sm:$0xff]
    %v443 = vld [vmem:[%s3 + $0x30] sm:$0xff]
    %v444 = vld [vmem:[%s3 + $0x38] sm:$0xff]
    %v445 = vld [vmem:[%s3 + $0x40] sm:$0xff]
    %v446 = vld [vmem:[%s3 + $0x48] sm:$0xff]
    %v447 = vld [vmem:[%s3 + $0x50] sm:$0xff]
    %v448 = vld [vmem:[%s3 + $0x58] sm:$0xff]
    %v449 = vld [vmem:[%s3 + $0x60] sm:$0xff]
    %v450 = vld [vmem:[%s3 + $0x68] sm:$0xff]
    %v451 = vld [vmem:[%s3 + $0x70] sm:$0xff]
    %v452 = vld [vmem:[%s3 + $0x78] sm:$0xff]
    %v453 = vld [vmem:[#allocation2] sm:$0xff]
    %v454 = vld [vmem:[#allocation2 + $0xb0] sm:$0xff]
    %vm455 = vcmask 523264
    %v457 = vsel %vm455, 0.0, 0
    %459 = vmatprep.subr.mxu0 0.0
    %460 = vmatpush1.msra.mxu0 0.0
    %461 = vmatprep.subr.mxu0 0.0
    %462 = vmatpush1.msra.mxu0 0.0
    %463 = vmatprep.subr.mxu0 0.0
    %464 = vmatpush1.msra.mxu0 0.0
    %465 = vmatprep.subr.mxu0 0.0
    %466 = vmatpush1.msra.mxu0 0.0
    %467 = vmatprep.subr.mxu0 0.0
    %468 = vmatpush1.msra.mxu0 0.0
    %469 = vmatprep.subr.mxu0 0.0
    %470 = vmatpush1.msra.mxu0 0.0
    %471 = vmatprep.subr.mxu0 0.0
    %472 = vmatpush1.msra.mxu0 0.0
    %473 = vmatprep.subr.mxu0 0.0
    %474 = vmatpush1.msra.mxu0 0.0
    %475 = vmatprep.subr.mxu0 %v452
    %476 = vmatpush1.msra.mxu0 %v451
    %477 = vmatprep.subr.mxu0 %v450
    %478 = vmatpush1.msra.mxu0 %v449
    %479 = vmatprep.subr.mxu0 %v448
    %480 = vmatpush1.msra.mxu0 %v447
    %481 = vmatprep.subr.mxu0 %v446
    %482 = vmatpush1.msra.mxu0 %v445
    %483 = vmatprep.subr.mxu0 %v444
    %484 = vmatpush1.msra.mxu0 %v443
    %485 = vmatprep.subr.mxu0 %v442
    %486 = vmatpush1.msra.mxu0 %v441
    %487 = vmatprep.subr.mxu0 %v440
    %488 = vmatpush1.msra.mxu0 %v439
    %489 = vmatprep.subr.mxu0 %v438
    %490 = vmatpush1.msra.mxu0 %v437
    %491 = vmatprep.subr.mxu0 0.0
    %492 = vmatpush2.msra.mxu0 0.0
    %493 = vmatprep.subr.mxu0 0.0
    %494 = vmatpush2.msra.mxu0 0.0
    %495 = vmatprep.subr.mxu0 0.0
    %496 = vmatpush2.msra.mxu0 0.0
    %497 = vmatprep.subr.mxu0 0.0
    %498 = vmatpush2.msra.mxu0 0.0
    %499 = vmatprep.subr.mxu0 0.0
    %500 = vmatpush2.msra.mxu0 0.0
    %501 = vmatprep.subr.mxu0 0.0
    %502 = vmatpush2.msra.mxu0 0.0
    %503 = vmatprep.subr.mxu0 0.0
    %504 = vmatpush2.msra.mxu0 0.0
    %505 = vmatprep.subr.mxu0 0.0
    %506 = vmatpush2.msra.mxu0 0.0
    %507 = vmatprep.subr.mxu0 0.0
    %508 = vmatpush2.msra.mxu0 0.0
    %509 = vmatprep.subr.mxu0 0.0
    %510 = vmatpush2.msra.mxu0 0.0
    %511 = vmatprep.subr.mxu0 0.0
    %512 = vmatpush2.msra.mxu0 0.0
    %513 = vmatprep.subr.mxu0 0.0
    %514 = vmatpush2.msra.mxu0 0.0
    %515 = vmatprep.subr.mxu0 0.0
    %516 = vmatpush2.msra.mxu0 0.0
    %517 = vmatprep.subr.mxu0 0.0
    %518 = vmatpush2.msra.mxu0 0.0
    %519 = vmatprep.subr.mxu0 0.0
    %520 = vmatpush2.msra.mxu0 0.0
    %521 = vmatprep.subr.mxu0 0.0
    %522 = vmatpush2.msra.mxu0 0.0
    %523 = vmatprep.mubr.f32.mxu0 0.0
    %524 = vmatmul.mubr.f32.gmra.mxu0 %v457
    %v525 = vpop.f32.mrf.mxu0
    %v526 = vadd.f32 %v453, %v525
    %v527 = vpop.f32.mrf.mxu0
    %v528 = vadd.f32 %v454, %v527
    %529 = vdwg.mxu0
    %v530 = vxor.u32 %v526, 2147483648
    %v531 = vxor.u32 %v528, 2147483648
    %v532 = vmul.f32 %v530, 1.442695
    %v533 = vpow.pop %v532
    %v534 = vmul.f32 %v531, 1.442695
    %v535 = vpow.pop %v534
    %v536 = vadd.f32 %v533, 1.0
    %v537 = vadd.f32 %v535, 1.0
    %v538 = vrcp.pop %v536
    %v539 = vmul.f32 1.0, %v538
    %v540 = vrcp.pop %v537
    %v541 = vmul.f32 1.0, %v540
    %v542 = vtanh.pop %v526
    %v543 = vtanh.pop %v528
    %v544 = vmul.f32 %v539, 0.0
    %546 = vrot.lane.b32.xlu0 %v542, 64
    %v547 = vpop.permute.xlu0 %546
    %v549 = vmul.f32 %v539, %v547
    %551 = vrot.lane.b32.xlu0 %v549, 32
    %v552 = vpop.permute.xlu0 %551
    %v554 = vadd.f32 %v544, %v552
    %v555 = vtanh.pop %v554
    %557 = vrot.lane.b32.xlu0 %v555, 64
    %v558 = vpop.permute.xlu0 %557
    %v560 = vmul.f32 %v539, %v558
    %v561 = vmul.f32 %v541, 0.0
    %563 = vrot.lane.b32.xlu0 %v543, 64
    %v564 = vpop.permute.xlu0 %563
    %v566 = vmul.f32 %v541, %v564
    %568 = vrot.lane.b32.xlu0 %v566, 32
    %v569 = vpop.permute.xlu0 %568
    %v571 = vadd.f32 %v561, %v569
    %v572 = vtanh.pop %v571
    %574 = vrot.lane.b32.xlu0 %v572, 64
    %v575 = vpop.permute.xlu0 %574
    %v577 = vmul.f32 %v541, %v575
    %579 = vrot.lane.b32.xlu0 %v560, 32
    %v580 = vpop.permute.xlu0 %579
    %583 = vrot.lane.b32.xlu0 %v577, 64
    %v584 = vpop.permute.xlu0 %583
    %v586 = vsel %vm357, %v580, %v584
    %v587 = vld [vmem:[#allocation2 + $0x18] sm:$0xff]
    %v588 = vld [vmem:[#allocation2 + $0x98] sm:$0xff]
    %v590 = vsel %vm455, %v586, 0
    %592 = vmatprep.subr.mxu0 0.0
    %593 = vmatpush1.msra.mxu0 0.0
    %594 = vmatprep.subr.mxu0 0.0
    %595 = vmatpush1.msra.mxu0 0.0
    %596 = vmatprep.subr.mxu0 0.0
    %597 = vmatpush1.msra.mxu0 0.0
    %598 = vmatprep.subr.mxu0 0.0
    %599 = vmatpush1.msra.mxu0 0.0
    %600 = vmatprep.subr.mxu0 0.0
    %601 = vmatpush1.msra.mxu0 0.0
    %602 = vmatprep.subr.mxu0 0.0
    %603 = vmatpush1.msra.mxu0 0.0
    %604 = vmatprep.subr.mxu0 0.0
    %605 = vmatpush1.msra.mxu0 0.0
    %606 = vmatprep.subr.mxu0 0.0
    %607 = vmatpush1.msra.mxu0 0.0
    %608 = vmatprep.subr.mxu0 %v452
    %609 = vmatpush1.msra.mxu0 %v451
    %610 = vmatprep.subr.mxu0 %v450
    %611 = vmatpush1.msra.mxu0 %v449
    %612 = vmatprep.subr.mxu0 %v448
    %613 = vmatpush1.msra.mxu0 %v447
    %614 = vmatprep.subr.mxu0 %v446
    %615 = vmatpush1.msra.mxu0 %v445
    %616 = vmatprep.subr.mxu0 %v444
    %617 = vmatpush1.msra.mxu0 %v443
    %618 = vmatprep.subr.mxu0 %v442
    %619 = vmatpush1.msra.mxu0 %v441
    %620 = vmatprep.subr.mxu0 %v440
    %621 = vmatpush1.msra.mxu0 %v439
    %622 = vmatprep.subr.mxu0 %v438
    %623 = vmatpush1.msra.mxu0 %v437
    %624 = vmatprep.subr.mxu0 0.0
    %625 = vmatpush2.msra.mxu0 0.0
    %626 = vmatprep.subr.mxu0 0.0
    %627 = vmatpush2.msra.mxu0 0.0
    %628 = vmatprep.subr.mxu0 0.0
    %629 = vmatpush2.msra.mxu0 0.0
    %630 = vmatprep.subr.mxu0 0.0
    %631 = vmatpush2.msra.mxu0 0.0
    %632 = vmatprep.subr.mxu0 0.0
    %633 = vmatpush2.msra.mxu0 0.0
    %634 = vmatprep.subr.mxu0 0.0
    %635 = vmatpush2.msra.mxu0 0.0
    %636 = vmatprep.subr.mxu0 0.0
    %637 = vmatpush2.msra.mxu0 0.0
    %638 = vmatprep.subr.mxu0 0.0
    %639 = vmatpush2.msra.mxu0 0.0
    %640 = vmatprep.subr.mxu0 0.0
    %641 = vmatpush2.msra.mxu0 0.0
    %642 = vmatprep.subr.mxu0 0.0
    %643 = vmatpush2.msra.mxu0 0.0
    %644 = vmatprep.subr.mxu0 0.0
    %645 = vmatpush2.msra.mxu0 0.0
    %646 = vmatprep.subr.mxu0 0.0
    %647 = vmatpush2.msra.mxu0 0.0
    %648 = vmatprep.subr.mxu0 0.0
    %649 = vmatpush2.msra.mxu0 0.0
    %650 = vmatprep.subr.mxu0 0.0
    %651 = vmatpush2.msra.mxu0 0.0
    %652 = vmatprep.subr.mxu0 0.0
    %653 = vmatpush2.msra.mxu0 0.0
    %654 = vmatprep.subr.mxu0 0.0
    %655 = vmatpush2.msra.mxu0 0.0
    %656 = vmatprep.mubr.f32.mxu0 0.0
    %657 = vmatmul.mubr.f32.gmra.mxu0 %v590
    %v658 = vpop.f32.mrf.mxu0
    %v659 = vadd.f32 %v587, %v658
    %v660 = vpop.f32.mrf.mxu0
    %v661 = vadd.f32 %v588, %v660
    %662 = vdwg.mxu0
    %v663 = vxor.u32 %v659, 2147483648
    %v664 = vxor.u32 %v661, 2147483648
    %v665 = vmul.f32 %v663, 1.442695
    %v666 = vpow.pop %v665
    %v667 = vmul.f32 %v664, 1.442695
    %v668 = vpow.pop %v667
    %v669 = vadd.f32 %v666, 1.0
    %v670 = vadd.f32 %v668, 1.0
    %v671 = vrcp.pop %v669
    %v672 = vmul.f32 1.0, %v671
    %v673 = vrcp.pop %v670
    %v674 = vmul.f32 1.0, %v673
    %v675 = vtanh.pop %v659
    %v676 = vtanh.pop %v661
    %v677 = vmul.f32 %v672, %v554
    %679 = vrot.lane.b32.xlu0 %v675, 64
    %v680 = vpop.permute.xlu0 %679
    %v682 = vmul.f32 %v672, %v680
    %684 = vrot.lane.b32.xlu0 %v682, 32
    %v685 = vpop.permute.xlu0 %684
    %v687 = vadd.f32 %v677, %v685
    %v688 = vtanh.pop %v687
    %690 = vrot.lane.b32.xlu0 %v688, 64
    %v691 = vpop.permute.xlu0 %690
    %v693 = vmul.f32 %v672, %v691
    %v694 = vmul.f32 %v674, %v571
    %696 = vrot.lane.b32.xlu0 %v676, 64
    %v697 = vpop.permute.xlu0 %696
    %v699 = vmul.f32 %v674, %v697
    %701 = vrot.lane.b32.xlu0 %v699, 32
    %v702 = vpop.permute.xlu0 %701
    %v704 = vadd.f32 %v694, %v702
    %v705 = vtanh.pop %v704
    %707 = vrot.lane.b32.xlu0 %v705, 64
    %v708 = vpop.permute.xlu0 %707
    %v710 = vmul.f32 %v674, %v708
    %712 = vrot.lane.b32.xlu0 %v693, 32
    %v713 = vpop.permute.xlu0 %712
    %716 = vrot.lane.b32.xlu0 %v710, 64
    %v717 = vpop.permute.xlu0 %716
    %v719 = vsel %vm357, %v713, %v717
    %v720 = vld [vmem:[#allocation2 + $0x30] sm:$0xff]
    %v721 = vld [vmem:[#allocation2 + $0x80] sm:$0xff]
    %v723 = vsel %vm455, %v719, 0
    %725 = vmatprep.subr.mxu0 0.0
    %726 = vmatpush1.msra.mxu0 0.0
    %727 = vmatprep.subr.mxu0 0.0
    %728 = vmatpush1.msra.mxu0 0.0
    %729 = vmatprep.subr.mxu0 0.0
    %730 = vmatpush1.msra.mxu0 0.0
    %731 = vmatprep.subr.mxu0 0.0
    %732 = vmatpush1.msra.mxu0 0.0
    %733 = vmatprep.subr.mxu0 0.0
    %734 = vmatpush1.msra.mxu0 0.0
    %735 = vmatprep.subr.mxu0 0.0
    %736 = vmatpush1.msra.mxu0 0.0
    %737 = vmatprep.subr.mxu0 0.0
    %738 = vmatpush1.msra.mxu0 0.0
    %739 = vmatprep.subr.mxu0 0.0
    %740 = vmatpush1.msra.mxu0 0.0
    %741 = vmatprep.subr.mxu0 %v452
    %742 = vmatpush1.msra.mxu0 %v451
    %743 = vmatprep.subr.mxu0 %v450
    %744 = vmatpush1.msra.mxu0 %v449
    %745 = vmatprep.subr.mxu0 %v448
    %746 = vmatpush1.msra.mxu0 %v447
    %747 = vmatprep.subr.mxu0 %v446
    %748 = vmatpush1.msra.mxu0 %v445
    %749 = vmatprep.subr.mxu0 %v444
    %750 = vmatpush1.msra.mxu0 %v443
    %751 = vmatprep.subr.mxu0 %v442
    %752 = vmatpush1.msra.mxu0 %v441
    %753 = vmatprep.subr.mxu0 %v440
    %754 = vmatpush1.msra.mxu0 %v439
    %755 = vmatprep.subr.mxu0 %v438
    %756 = vmatpush1.msra.mxu0 %v437
    %757 = vmatprep.subr.mxu0 0.0
    %758 = vmatpush2.msra.mxu0 0.0
    %759 = vmatprep.subr.mxu0 0.0
    %760 = vmatpush2.msra.mxu0 0.0
    %761 = vmatprep.subr.mxu0 0.0
    %762 = vmatpush2.msra.mxu0 0.0
    %763 = vmatprep.subr.mxu0 0.0
    %764 = vmatpush2.msra.mxu0 0.0
    %765 = vmatprep.subr.mxu0 0.0
    %766 = vmatpush2.msra.mxu0 0.0
    %767 = vmatprep.subr.mxu0 0.0
    %768 = vmatpush2.msra.mxu0 0.0
    %769 = vmatprep.subr.mxu0 0.0
    %770 = vmatpush2.msra.mxu0 0.0
    %771 = vmatprep.subr.mxu0 0.0
    %772 = vmatpush2.msra.mxu0 0.0
    %773 = vmatprep.subr.mxu0 0.0
    %774 = vmatpush2.msra.mxu0 0.0
    %775 = vmatprep.subr.mxu0 0.0
    %776 = vmatpush2.msra.mxu0 0.0
    %777 = vmatprep.subr.mxu0 0.0
    %778 = vmatpush2.msra.mxu0 0.0
    %779 = vmatprep.subr.mxu0 0.0
    %780 = vmatpush2.msra.mxu0 0.0
    %781 = vmatprep.subr.mxu0 0.0
    %782 = vmatpush2.msra.mxu0 0.0
    %783 = vmatprep.subr.mxu0 0.0
    %784 = vmatpush2.msra.mxu0 0.0
    %785 = vmatprep.subr.mxu0 0.0
    %786 = vmatpush2.msra.mxu0 0.0
    %787 = vmatprep.subr.mxu0 0.0
    %788 = vmatpush2.msra.mxu0 0.0
    %789 = vmatprep.mubr.f32.mxu0 0.0
    %790 = vmatmul.mubr.f32.gmra.mxu0 %v723
    %v791 = vpop.f32.mrf.mxu0
    %v792 = vadd.f32 %v720, %v791
    %v793 = vpop.f32.mrf.mxu0
    %v794 = vadd.f32 %v721, %v793
    %795 = vdwg.mxu0
    %v796 = vxor.u32 %v792, 2147483648
    %v797 = vxor.u32 %v794, 2147483648
    %v798 = vmul.f32 %v796, 1.442695
    %v799 = vpow.pop %v798
    %v800 = vmul.f32 %v797, 1.442695
    %v801 = vpow.pop %v800
    %v802 = vadd.f32 %v799, 1.0
    %v803 = vadd.f32 %v801, 1.0
    %v804 = vrcp.pop %v802
    %v805 = vmul.f32 1.0, %v804
    %v806 = vrcp.pop %v803
    %v807 = vmul.f32 1.0, %v806
    %v808 = vtanh.pop %v792
    %v809 = vtanh.pop %v794
    %v810 = vmul.f32 %v805, %v687
    %812 = vrot.lane.b32.xlu0 %v808, 64
    %v813 = vpop.permute.xlu0 %812
    %v815 = vmul.f32 %v805, %v813
    %817 = vrot.lane.b32.xlu0 %v815, 32
    %v818 = vpop.permute.xlu0 %817
    %v820 = vadd.f32 %v810, %v818
    %v821 = vtanh.pop %v820
    %823 = vrot.lane.b32.xlu0 %v821, 64
    %v824 = vpop.permute.xlu0 %823
    %v826 = vmul.f32 %v805, %v824
    %v827 = vmul.f32 %v807, %v704
    %829 = vrot.lane.b32.xlu0 %v809, 64
    %v830 = vpop.permute.xlu0 %829
    %v832 = vmul.f32 %v807, %v830
    %834 = vrot.lane.b32.xlu0 %v832, 32
    %v835 = vpop.permute.xlu0 %834
    %v837 = vadd.f32 %v827, %v835
    %v838 = vtanh.pop %v837
    %840 = vrot.lane.b32.xlu0 %v838, 64
    %v841 = vpop.permute.xlu0 %840
    %v843 = vmul.f32 %v807, %v841
    %845 = vrot.lane.b32.xlu0 %v826, 32
    %v846 = vpop.permute.xlu0 %845
    %849 = vrot.lane.b32.xlu0 %v843, 64
    %v850 = vpop.permute.xlu0 %849
    %v852 = vsel %vm357, %v846, %v850
    %v853 = vld [vmem:[#allocation2 + $0x48] sm:$0xff]
    %v854 = vld [vmem:[#allocation2 + $0x68] sm:$0xff]
    %v856 = vsel %vm455, %v852, 0
    %858 = vmatprep.subr.mxu0 0.0
    %859 = vmatpush1.msra.mxu0 0.0
    %860 = vmatprep.subr.mxu0 0.0
    %861 = vmatpush1.msra.mxu0 0.0
    %862 = vmatprep.subr.mxu0 0.0
    %863 = vmatpush1.msra.mxu0 0.0
    %864 = vmatprep.subr.mxu0 0.0
    %865 = vmatpush1.msra.mxu0 0.0
    %866 = vmatprep.subr.mxu0 0.0
    %867 = vmatpush1.msra.mxu0 0.0
    %868 = vmatprep.subr.mxu0 0.0
    %869 = vmatpush1.msra.mxu0 0.0
    %870 = vmatprep.subr.mxu0 0.0
    %871 = vmatpush1.msra.mxu0 0.0
    %872 = vmatprep.subr.mxu0 0.0
    %873 = vmatpush1.msra.mxu0 0.0
    %874 = vmatprep.subr.mxu0 %v452
    %875 = vmatpush1.msra.mxu0 %v451
    %876 = vmatprep.subr.mxu0 %v450
    %877 = vmatpush1.msra.mxu0 %v449
    %878 = vmatprep.subr.mxu0 %v448
    %879 = vmatpush1.msra.mxu0 %v447
    %880 = vmatprep.subr.mxu0 %v446
    %881 = vmatpush1.msra.mxu0 %v445
    %882 = vmatprep.subr.mxu0 %v444
    %883 = vmatpush1.msra.mxu0 %v443
    %884 = vmatprep.subr.mxu0 %v442
    %885 = vmatpush1.msra.mxu0 %v441
    %886 = vmatprep.subr.mxu0 %v440
    %887 = vmatpush1.msra.mxu0 %v439
    %888 = vmatprep.subr.mxu0 %v438
    %889 = vmatpush1.msra.mxu0 %v437
    %890 = vmatprep.subr.mxu0 0.0
    %891 = vmatpush2.msra.mxu0 0.0
    %892 = vmatprep.subr.mxu0 0.0
    %893 = vmatpush2.msra.mxu0 0.0
    %894 = vmatprep.subr.mxu0 0.0
    %895 = vmatpush2.msra.mxu0 0.0
    %896 = vmatprep.subr.mxu0 0.0
    %897 = vmatpush2.msra.mxu0 0.0
    %898 = vmatprep.subr.mxu0 0.0
    %899 = vmatpush2.msra.mxu0 0.0
    %900 = vmatprep.subr.mxu0 0.0
    %901 = vmatpush2.msra.mxu0 0.0
    %902 = vmatprep.subr.mxu0 0.0
    %903 = vmatpush2.msra.mxu0 0.0
    %904 = vmatprep.subr.mxu0 0.0
    %905 = vmatpush2.msra.mxu0 0.0
    %906 = vmatprep.subr.mxu0 0.0
    %907 = vmatpush2.msra.mxu0 0.0
    %908 = vmatprep.subr.mxu0 0.0
    %909 = vmatpush2.msra.mxu0 0.0
    %910 = vmatprep.subr.mxu0 0.0
    %911 = vmatpush2.msra.mxu0 0.0
    %912 = vmatprep.subr.mxu0 0.0
    %913 = vmatpush2.msra.mxu0 0.0
    %914 = vmatprep.subr.mxu0 0.0
    %915 = vmatpush2.msra.mxu0 0.0
    %916 = vmatprep.subr.mxu0 0.0
    %917 = vmatpush2.msra.mxu0 0.0
    %918 = vmatprep.subr.mxu0 0.0
    %919 = vmatpush2.msra.mxu0 0.0
    %920 = vmatprep.subr.mxu0 0.0
    %921 = vmatpush2.msra.mxu0 0.0
    %922 = vmatprep.mubr.f32.mxu0 0.0
    %923 = vmatmul.mubr.f32.gmra.mxu0 %v856
    %v924 = vpop.f32.mrf.mxu0
    %v925 = vadd.f32 %v853, %v924
    %v926 = vpop.f32.mrf.mxu0
    %v927 = vadd.f32 %v854, %v926
    %928 = vdwg.mxu0
    %v929 = vxor.u32 %v925, 2147483648
    %v930 = vxor.u32 %v927, 2147483648
    %v931 = vmul.f32 %v929, 1.442695
    %v932 = vpow.pop %v931
    %v933 = vmul.f32 %v930, 1.442695
    %v934 = vpow.pop %v933
    %v935 = vadd.f32 %v932, 1.0
    %v936 = vadd.f32 %v934, 1.0
    %v937 = vrcp.pop %v935
    %v938 = vmul.f32 1.0, %v937
    %v939 = vrcp.pop %v936
    %v940 = vmul.f32 1.0, %v939
    %v941 = vtanh.pop %v925
    %v942 = vtanh.pop %v927
    %v943 = vmul.f32 %v938, %v820
    %945 = vrot.lane.b32.xlu0 %v941, 64
    %v946 = vpop.permute.xlu0 %945
    %v948 = vmul.f32 %v938, %v946
    %950 = vrot.lane.b32.xlu0 %v948, 32
    %v951 = vpop.permute.xlu0 %950
    %v953 = vadd.f32 %v943, %v951
    %v954 = vtanh.pop %v953
    %956 = vrot.lane.b32.xlu0 %v954, 64
    %v957 = vpop.permute.xlu0 %956
    %v959 = vmul.f32 %v938, %v957
    %v960 = vmul.f32 %v940, %v837
    %962 = vrot.lane.b32.xlu0 %v942, 64
    %v963 = vpop.permute.xlu0 %962
    %v965 = vmul.f32 %v940, %v963
    %967 = vrot.lane.b32.xlu0 %v965, 32
    %v968 = vpop.permute.xlu0 %967
    %v970 = vadd.f32 %v960, %v968
    %v971 = vtanh.pop %v970
    %973 = vrot.lane.b32.xlu0 %v971, 64
    %v974 = vpop.permute.xlu0 %973
    %v976 = vmul.f32 %v940, %v974
    %978 = vrot.lane.b32.xlu0 %v959, 32
    %v979 = vpop.permute.xlu0 %978
    %982 = vrot.lane.b32.xlu0 %v976, 64
    %v983 = vpop.permute.xlu0 %982
    %v985 = vsel %vm357, %v979, %v983
    %v986 = vld [vmem:[#allocation2 + $0x60] sm:$0xff]
    %v987 = vld [vmem:[#allocation2 + $0x50] sm:$0xff]
    %v989 = vsel %vm455, %v985, 0
    %991 = vmatprep.subr.mxu0 0.0
    %992 = vmatpush1.msra.mxu0 0.0
    %993 = vmatprep.subr.mxu0 0.0
    %994 = vmatpush1.msra.mxu0 0.0
    %995 = vmatprep.subr.mxu0 0.0
    %996 = vmatpush1.msra.mxu0 0.0
    %997 = vmatprep.subr.mxu0 0.0
    %998 = vmatpush1.msra.mxu0 0.0
    %999 = vmatprep.subr.mxu0 0.0
    %1000 = vmatpush1.msra.mxu0 0.0
    %1001 = vmatprep.subr.mxu0 0.0
    %1002 = vmatpush1.msra.mxu0 0.0
    %1003 = vmatprep.subr.mxu0 0.0
    %1004 = vmatpush1.msra.mxu0 0.0
    %1005 = vmatprep.subr.mxu0 0.0
    %1006 = vmatpush1.msra.mxu0 0.0
    %1007 = vmatprep.subr.mxu0 %v452
    %1008 = vmatpush1.msra.mxu0 %v451
    %1009 = vmatprep.subr.mxu0 %v450
    %1010 = vmatpush1.msra.mxu0 %v449
    %1011 = vmatprep.subr.mxu0 %v448
    %1012 = vmatpush1.msra.mxu0 %v447
    %1013 = vmatprep.subr.mxu0 %v446
    %1014 = vmatpush1.msra.mxu0 %v445
    %1015 = vmatprep.subr.mxu0 %v444
    %1016 = vmatpush1.msra.mxu0 %v443
    %1017 = vmatprep.subr.mxu0 %v442
    %1018 = vmatpush1.msra.mxu0 %v441
    %1019 = vmatprep.subr.mxu0 %v440
    %1020 = vmatpush1.msra.mxu0 %v439
    %1021 = vmatprep.subr.mxu0 %v438
    %1022 = vmatpush1.msra.mxu0 %v437
    %1023 = vmatprep.subr.mxu0 0.0
    %1024 = vmatpush2.msra.mxu0 0.0
    %1025 = vmatprep.subr.mxu0 0.0
    %1026 = vmatpush2.msra.mxu0 0.0
    %1027 = vmatprep.subr.mxu0 0.0
    %1028 = vmatpush2.msra.mxu0 0.0
    %1029 = vmatprep.subr.mxu0 0.0
    %1030 = vmatpush2.msra.mxu0 0.0
    %1031 = vmatprep.subr.mxu0 0.0
    %1032 = vmatpush2.msra.mxu0 0.0
    %1033 = vmatprep.subr.mxu0 0.0
    %1034 = vmatpush2.msra.mxu0 0.0
    %1035 = vmatprep.subr.mxu0 0.0
    %1036 = vmatpush2.msra.mxu0 0.0
    %1037 = vmatprep.subr.mxu0 0.0
    %1038 = vmatpush2.msra.mxu0 0.0
    %1039 = vmatprep.subr.mxu0 0.0
    %1040 = vmatpush2.msra.mxu0 0.0
    %1041 = vmatprep.subr.mxu0 0.0
    %1042 = vmatpush2.msra.mxu0 0.0
    %1043 = vmatprep.subr.mxu0 0.0
    %1044 = vmatpush2.msra.mxu0 0.0
    %1045 = vmatprep.subr.mxu0 0.0
    %1046 = vmatpush2.msra.mxu0 0.0
    %1047 = vmatprep.subr.mxu0 0.0
    %1048 = vmatpush2.msra.mxu0 0.0
    %1049 = vmatprep.subr.mxu0 0.0
    %1050 = vmatpush2.msra.mxu0 0.0
    %1051 = vmatprep.subr.mxu0 0.0
    %1052 = vmatpush2.msra.mxu0 0.0
    %1053 = vmatprep.subr.mxu0 0.0
    %1054 = vmatpush2.msra.mxu0 0.0
    %1055 = vmatprep.mubr.f32.mxu0 0.0
    %1056 = vmatmul.mubr.f32.gmra.mxu0 %v989
    %v1057 = vpop.f32.mrf.mxu0
    %v1058 = vadd.f32 %v986, %v1057
    %v1059 = vpop.f32.mrf.mxu0
    %v1060 = vadd.f32 %v987, %v1059
    %1061 = vdwg.mxu0
    %v1062 = vxor.u32 %v1058, 2147483648
    %v1063 = vxor.u32 %v1060, 2147483648
    %v1064 = vmul.f32 %v1062, 1.442695
    %v1065 = vpow.pop %v1064
    %v1066 = vmul.f32 %v1063, 1.442695
    %v1067 = vpow.pop %v1066
    %v1068 = vadd.f32 %v1065, 1.0
    %v1069 = vadd.f32 %v1067, 1.0
    %v1070 = vrcp.pop %v1068
    %v1071 = vmul.f32 1.0, %v1070
    %v1072 = vrcp.pop %v1069
    %v1073 = vmul.f32 1.0, %v1072
    %v1074 = vtanh.pop %v1058
    %v1075 = vtanh.pop %v1060
    %v1076 = vmul.f32 %v1071, %v953
    %1078 = vrot.lane.b32.xlu0 %v1074, 64
    %v1079 = vpop.permute.xlu0 %1078
    %v1081 = vmul.f32 %v1071, %v1079
    %1083 = vrot.lane.b32.xlu0 %v1081, 32
    %v1084 = vpop.permute.xlu0 %1083
    %v1086 = vadd.f32 %v1076, %v1084
    %v1087 = vtanh.pop %v1086
    %1089 = vrot.lane.b32.xlu0 %v1087, 64
    %v1090 = vpop.permute.xlu0 %1089
    %v1092 = vmul.f32 %v1071, %v1090
    %v1093 = vmul.f32 %v1073, %v970
    %1095 = vrot.lane.b32.xlu0 %v1075, 64
    %v1096 = vpop.permute.xlu0 %1095
    %v1098 = vmul.f32 %v1073, %v1096
    %1100 = vrot.lane.b32.xlu0 %v1098, 32
    %v1101 = vpop.permute.xlu0 %1100
    %v1103 = vadd.f32 %v1093, %v1101
    %v1104 = vtanh.pop %v1103
    %1106 = vrot.lane.b32.xlu0 %v1104, 64
    %v1107 = vpop.permute.xlu0 %1106
    %v1109 = vmul.f32 %v1073, %v1107
    %1111 = vrot.lane.b32.xlu0 %v1092, 32
    %v1112 = vpop.permute.xlu0 %1111
    %1115 = vrot.lane.b32.xlu0 %v1109, 64
    %v1116 = vpop.permute.xlu0 %1115
    %v1118 = vsel %vm357, %v1112, %v1116
    %v1119 = vld [vmem:[#allocation2 + $0x78] sm:$0xff]
    %v1120 = vld [vmem:[#allocation2 + $0x38] sm:$0xff]
    %v1122 = vsel %vm455, %v1118, 0
    %1124 = vmatprep.subr.mxu0 0.0
    %1125 = vmatpush1.msra.mxu0 0.0
    %1126 = vmatprep.subr.mxu0 0.0
    %1127 = vmatpush1.msra.mxu0 0.0
    %1128 = vmatprep.subr.mxu0 0.0
    %1129 = vmatpush1.msra.mxu0 0.0
    %1130 = vmatprep.subr.mxu0 0.0
    %1131 = vmatpush1.msra.mxu0 0.0
    %1132 = vmatprep.subr.mxu0 0.0
    %1133 = vmatpush1.msra.mxu0 0.0
    %1134 = vmatprep.subr.mxu0 0.0
    %1135 = vmatpush1.msra.mxu0 0.0
    %1136 = vmatprep.subr.mxu0 0.0
    %1137 = vmatpush1.msra.mxu0 0.0
    %1138 = vmatprep.subr.mxu0 0.0
    %1139 = vmatpush1.msra.mxu0 0.0
    %1140 = vmatprep.subr.mxu0 %v452
    %1141 = vmatpush1.msra.mxu0 %v451
    %1142 = vmatprep.subr.mxu0 %v450
    %1143 = vmatpush1.msra.mxu0 %v449
    %1144 = vmatprep.subr.mxu0 %v448
    %1145 = vmatpush1.msra.mxu0 %v447
    %1146 = vmatprep.subr.mxu0 %v446
    %1147 = vmatpush1.msra.mxu0 %v445
    %1148 = vmatprep.subr.mxu0 %v444
    %1149 = vmatpush1.msra.mxu0 %v443
    %1150 = vmatprep.subr.mxu0 %v442
    %1151 = vmatpush1.msra.mxu0 %v441
    %1152 = vmatprep.subr.mxu0 %v440
    %1153 = vmatpush1.msra.mxu0 %v439
    %1154 = vmatprep.subr.mxu0 %v438
    %1155 = vmatpush1.msra.mxu0 %v437
    %1156 = vmatprep.subr.mxu0 0.0
    %1157 = vmatpush2.msra.mxu0 0.0
    %1158 = vmatprep.subr.mxu0 0.0
    %1159 = vmatpush2.msra.mxu0 0.0
    %1160 = vmatprep.subr.mxu0 0.0
    %1161 = vmatpush2.msra.mxu0 0.0
    %1162 = vmatprep.subr.mxu0 0.0
    %1163 = vmatpush2.msra.mxu0 0.0
    %1164 = vmatprep.subr.mxu0 0.0
    %1165 = vmatpush2.msra.mxu0 0.0
    %1166 = vmatprep.subr.mxu0 0.0
    %1167 = vmatpush2.msra.mxu0 0.0
    %1168 = vmatprep.subr.mxu0 0.0
    %1169 = vmatpush2.msra.mxu0 0.0
    %1170 = vmatprep.subr.mxu0 0.0
    %1171 = vmatpush2.msra.mxu0 0.0
    %1172 = vmatprep.subr.mxu0 0.0
    %1173 = vmatpush2.msra.mxu0 0.0
    %1174 = vmatprep.subr.mxu0 0.0
    %1175 = vmatpush2.msra.mxu0 0.0
    %1176 = vmatprep.subr.mxu0 0.0
    %1177 = vmatpush2.msra.mxu0 0.0
    %1178 = vmatprep.subr.mxu0 0.0
    %1179 = vmatpush2.msra.mxu0 0.0
    %1180 = vmatprep.subr.mxu0 0.0
    %1181 = vmatpush2.msra.mxu0 0.0
    %1182 = vmatprep.subr.mxu0 0.0
    %1183 = vmatpush2.msra.mxu0 0.0
    %1184 = vmatprep.subr.mxu0 0.0
    %1185 = vmatpush2.msra.mxu0 0.0
    %1186 = vmatprep.subr.mxu0 0.0
    %1187 = vmatpush2.msra.mxu0 0.0
    %1188 = vmatprep.mubr.f32.mxu0 0.0
    %1189 = vmatmul.mubr.f32.gmra.mxu0 %v1122
    %v1190 = vpop.f32.mrf.mxu0
    %v1191 = vadd.f32 %v1119, %v1190
    %v1192 = vpop.f32.mrf.mxu0
    %v1193 = vadd.f32 %v1120, %v1192
    %1194 = vdwg.mxu0
    %v1195 = vxor.u32 %v1191, 2147483648
    %v1196 = vxor.u32 %v1193, 2147483648
    %v1197 = vmul.f32 %v1195, 1.442695
    %v1198 = vpow.pop %v1197
    %v1199 = vmul.f32 %v1196, 1.442695
    %v1200 = vpow.pop %v1199
    %v1201 = vadd.f32 %v1198, 1.0
    %v1202 = vadd.f32 %v1200, 1.0
    %v1203 = vrcp.pop %v1201
    %v1204 = vmul.f32 1.0, %v1203
    %v1205 = vrcp.pop %v1202
    %v1206 = vmul.f32 1.0, %v1205
    %v1207 = vtanh.pop %v1191
    %v1208 = vtanh.pop %v1193
    %v1209 = vmul.f32 %v1204, %v1086
    %1211 = vrot.lane.b32.xlu0 %v1207, 64
    %v1212 = vpop.permute.xlu0 %1211
    %v1214 = vmul.f32 %v1204, %v1212
    %1216 = vrot.lane.b32.xlu0 %v1214, 32
    %v1217 = vpop.permute.xlu0 %1216
    %v1219 = vadd.f32 %v1209, %v1217
    %v1220 = vtanh.pop %v1219
    %1222 = vrot.lane.b32.xlu0 %v1220, 64
    %v1223 = vpop.permute.xlu0 %1222
    %v1225 = vmul.f32 %v1204, %v1223
    %v1226 = vmul.f32 %v1206, %v1103
    %1228 = vrot.lane.b32.xlu0 %v1208, 64
    %v1229 = vpop.permute.xlu0 %1228
    %v1231 = vmul.f32 %v1206, %v1229
    %1233 = vrot.lane.b32.xlu0 %v1231, 32
    %v1234 = vpop.permute.xlu0 %1233
    %v1236 = vadd.f32 %v1226, %v1234
    %v1237 = vtanh.pop %v1236
    %1239 = vrot.lane.b32.xlu0 %v1237, 64
    %v1240 = vpop.permute.xlu0 %1239
    %v1242 = vmul.f32 %v1206, %v1240
    %1244 = vrot.lane.b32.xlu0 %v1225, 32
    %v1245 = vpop.permute.xlu0 %1244
    %1248 = vrot.lane.b32.xlu0 %v1242, 64
    %v1249 = vpop.permute.xlu0 %1248
    %v1251 = vsel %vm357, %v1245, %v1249
    %v1252 = vld [vmem:[#allocation2 + $0x90] sm:$0xff]
    %v1253 = vld [vmem:[#allocation2 + $0x20] sm:$0xff]
    %v1255 = vsel %vm455, %v1251, 0
    %1257 = vmatprep.subr.mxu0 0.0
    %1258 = vmatpush1.msra.mxu0 0.0
    %1259 = vmatprep.subr.mxu0 0.0
    %1260 = vmatpush1.msra.mxu0 0.0
    %1261 = vmatprep.subr.mxu0 0.0
    %1262 = vmatpush1.msra.mxu0 0.0
    %1263 = vmatprep.subr.mxu0 0.0
    %1264 = vmatpush1.msra.mxu0 0.0
    %1265 = vmatprep.subr.mxu0 0.0
    %1266 = vmatpush1.msra.mxu0 0.0
    %1267 = vmatprep.subr.mxu0 0.0
    %1268 = vmatpush1.msra.mxu0 0.0
    %1269 = vmatprep.subr.mxu0 0.0
    %1270 = vmatpush1.msra.mxu0 0.0
    %1271 = vmatprep.subr.mxu0 0.0
    %1272 = vmatpush1.msra.mxu0 0.0
    %1273 = vmatprep.subr.mxu0 %v452
    %1274 = vmatpush1.msra.mxu0 %v451
    %1275 = vmatprep.subr.mxu0 %v450
    %1276 = vmatpush1.msra.mxu0 %v449
    %1277 = vmatprep.subr.mxu0 %v448
    %1278 = vmatpush1.msra.mxu0 %v447
    %1279 = vmatprep.subr.mxu0 %v446
    %1280 = vmatpush1.msra.mxu0 %v445
    %1281 = vmatprep.subr.mxu0 %v444
    %1282 = vmatpush1.msra.mxu0 %v443
    %1283 = vmatprep.subr.mxu0 %v442
    %1284 = vmatpush1.msra.mxu0 %v441
    %1285 = vmatprep.subr.mxu0 %v440
    %1286 = vmatpush1.msra.mxu0 %v439
    %1287 = vmatprep.subr.mxu0 %v438
    %1288 = vmatpush1.msra.mxu0 %v437
    %1289 = vmatprep.subr.mxu0 0.0
    %1290 = vmatpush2.msra.mxu0 0.0
    %1291 = vmatprep.subr.mxu0 0.0
    %1292 = vmatpush2.msra.mxu0 0.0
    %1293 = vmatprep.subr.mxu0 0.0
    %1294 = vmatpush2.msra.mxu0 0.0
    %1295 = vmatprep.subr.mxu0 0.0
    %1296 = vmatpush2.msra.mxu0 0.0
    %1297 = vmatprep.subr.mxu0 0.0
    %1298 = vmatpush2.msra.mxu0 0.0
    %1299 = vmatprep.subr.mxu0 0.0
    %1300 = vmatpush2.msra.mxu0 0.0
    %1301 = vmatprep.subr.mxu0 0.0
    %1302 = vmatpush2.msra.mxu0 0.0
    %1303 = vmatprep.subr.mxu0 0.0
    %1304 = vmatpush2.msra.mxu0 0.0
    %1305 = vmatprep.subr.mxu0 0.0
    %1306 = vmatpush2.msra.mxu0 0.0
    %1307 = vmatprep.subr.mxu0 0.0
    %1308 = vmatpush2.msra.mxu0 0.0
    %1309 = vmatprep.subr.mxu0 0.0
    %1310 = vmatpush2.msra.mxu0 0.0
    %1311 = vmatprep.subr.mxu0 0.0
    %1312 = vmatpush2.msra.mxu0 0.0
    %1313 = vmatprep.subr.mxu0 0.0
    %1314 = vmatpush2.msra.mxu0 0.0
    %1315 = vmatprep.subr.mxu0 0.0
    %1316 = vmatpush2.msra.mxu0 0.0
    %1317 = vmatprep.subr.mxu0 0.0
    %1318 = vmatpush2.msra.mxu0 0.0
    %1319 = vmatprep.subr.mxu0 0.0
    %1320 = vmatpush2.msra.mxu0 0.0
    %1321 = vmatprep.mubr.f32.mxu0 0.0
    %1322 = vmatmul.mubr.f32.gmra.mxu0 %v1255
    %v1323 = vpop.f32.mrf.mxu0
    %v1324 = vadd.f32 %v1252, %v1323
    %v1325 = vpop.f32.mrf.mxu0
    %v1326 = vadd.f32 %v1253, %v1325
    %1327 = vdwg.mxu0
    %v1328 = vxor.u32 %v1324, 2147483648
    %v1329 = vxor.u32 %v1326, 2147483648
    %v1330 = vmul.f32 %v1328, 1.442695
    %v1331 = vpow.pop %v1330
    %v1332 = vmul.f32 %v1329, 1.442695
    %v1333 = vpow.pop %v1332
    %v1334 = vadd.f32 %v1331, 1.0
    %v1335 = vadd.f32 %v1333, 1.0
    %v1336 = vrcp.pop %v1334
    %v1337 = vmul.f32 1.0, %v1336
    %v1338 = vrcp.pop %v1335
    %v1339 = vmul.f32 1.0, %v1338
    %v1340 = vtanh.pop %v1324
    %v1341 = vtanh.pop %v1326
    %v1342 = vmul.f32 %v1337, %v1219
    %1344 = vrot.lane.b32.xlu0 %v1340, 64
    %v1345 = vpop.permute.xlu0 %1344
    %v1347 = vmul.f32 %v1337, %v1345
    %1349 = vrot.lane.b32.xlu0 %v1347, 32
    %v1350 = vpop.permute.xlu0 %1349
    %v1352 = vadd.f32 %v1342, %v1350
    %v1353 = vtanh.pop %v1352
    %1355 = vrot.lane.b32.xlu0 %v1353, 64
    %v1356 = vpop.permute.xlu0 %1355
    %v1358 = vmul.f32 %v1337, %v1356
    %v1359 = vmul.f32 %v1339, %v1236
    %1361 = vrot.lane.b32.xlu0 %v1341, 64
    %v1362 = vpop.permute.xlu0 %1361
    %v1364 = vmul.f32 %v1339, %v1362
    %1366 = vrot.lane.b32.xlu0 %v1364, 32
    %v1367 = vpop.permute.xlu0 %1366
    %v1369 = vadd.f32 %v1359, %v1367
    %v1370 = vtanh.pop %v1369
    %1372 = vrot.lane.b32.xlu0 %v1370, 64
    %v1373 = vpop.permute.xlu0 %1372
    %v1375 = vmul.f32 %v1339, %v1373
    %1377 = vrot.lane.b32.xlu0 %v1358, 32
    %v1378 = vpop.permute.xlu0 %1377
    %1381 = vrot.lane.b32.xlu0 %v1375, 64
    %v1382 = vpop.permute.xlu0 %1381
    %v1384 = vsel %vm357, %v1378, %v1382
    %v1385 = vld [vmem:[#allocation2 + $0xa8] sm:$0xff]
    %v1386 = vld [vmem:[#allocation2 + $0x8] sm:$0xff]
    %v1388 = vsel %vm455, %v1384, 0
    %1390 = vmatprep.subr.mxu0 0.0
    %1391 = vmatpush1.msra.mxu0 0.0
    %1392 = vmatprep.subr.mxu0 0.0
    %1393 = vmatpush1.msra.mxu0 0.0
    %1394 = vmatprep.subr.mxu0 0.0
    %1395 = vmatpush1.msra.mxu0 0.0
    %1396 = vmatprep.subr.mxu0 0.0
    %1397 = vmatpush1.msra.mxu0 0.0
    %1398 = vmatprep.subr.mxu0 0.0
    %1399 = vmatpush1.msra.mxu0 0.0
    %1400 = vmatprep.subr.mxu0 0.0
    %1401 = vmatpush1.msra.mxu0 0.0
    %1402 = vmatprep.subr.mxu0 0.0
    %1403 = vmatpush1.msra.mxu0 0.0
    %1404 = vmatprep.subr.mxu0 0.0
    %1405 = vmatpush1.msra.mxu0 0.0
    %1406 = vmatprep.subr.mxu0 %v452
    %1407 = vmatpush1.msra.mxu0 %v451
    %1408 = vmatprep.subr.mxu0 %v450
    %1409 = vmatpush1.msra.mxu0 %v449
    %1410 = vmatprep.subr.mxu0 %v448
    %1411 = vmatpush1.msra.mxu0 %v447
    %1412 = vmatprep.subr.mxu0 %v446
    %1413 = vmatpush1.msra.mxu0 %v445
    %1414 = vmatprep.subr.mxu0 %v444
    %1415 = vmatpush1.msra.mxu0 %v443
    %1416 = vmatprep.subr.mxu0 %v442
    %1417 = vmatpush1.msra.mxu0 %v441
    %1418 = vmatprep.subr.mxu0 %v440
    %1419 = vmatpush1.msra.mxu0 %v439
    %1420 = vmatprep.subr.mxu0 %v438
    %1421 = vmatpush1.msra.mxu0 %v437
    %1422 = vmatprep.subr.mxu0 0.0
    %1423 = vmatpush2.msra.mxu0 0.0
    %1424 = vmatprep.subr.mxu0 0.0
    %1425 = vmatpush2.msra.mxu0 0.0
    %1426 = vmatprep.subr.mxu0 0.0
    %1427 = vmatpush2.msra.mxu0 0.0
    %1428 = vmatprep.subr.mxu0 0.0
    %1429 = vmatpush2.msra.mxu0 0.0
    %1430 = vmatprep.subr.mxu0 0.0
    %1431 = vmatpush2.msra.mxu0 0.0
    %1432 = vmatprep.subr.mxu0 0.0
    %1433 = vmatpush2.msra.mxu0 0.0
    %1434 = vmatprep.subr.mxu0 0.0
    %1435 = vmatpush2.msra.mxu0 0.0
    %1436 = vmatprep.subr.mxu0 0.0
    %1437 = vmatpush2.msra.mxu0 0.0
    %1438 = vmatprep.subr.mxu0 0.0
    %1439 = vmatpush2.msra.mxu0 0.0
    %1440 = vmatprep.subr.mxu0 0.0
    %1441 = vmatpush2.msra.mxu0 0.0
    %1442 = vmatprep.subr.mxu0 0.0
    %1443 = vmatpush2.msra.mxu0 0.0
    %1444 = vmatprep.subr.mxu0 0.0
    %1445 = vmatpush2.msra.mxu0 0.0
    %1446 = vmatprep.subr.mxu0 0.0
    %1447 = vmatpush2.msra.mxu0 0.0
    %1448 = vmatprep.subr.mxu0 0.0
    %1449 = vmatpush2.msra.mxu0 0.0
    %1450 = vmatprep.subr.mxu0 0.0
    %1451 = vmatpush2.msra.mxu0 0.0
    %1452 = vmatprep.subr.mxu0 0.0
    %1453 = vmatpush2.msra.mxu0 0.0
    %1454 = vmatprep.mubr.f32.mxu0 0.0
    %1455 = vmatmul.mubr.f32.gmra.mxu0 %v1388
    %v1456 = vpop.f32.mrf.mxu0
    %v1457 = vadd.f32 %v1385, %v1456
    %v1458 = vpop.f32.mrf.mxu0
    %v1459 = vadd.f32 %v1386, %v1458
    %1460 = vdwg.mxu0
    %v1461 = vxor.u32 %v1457, 2147483648
    %v1462 = vxor.u32 %v1459, 2147483648
    %v1463 = vmul.f32 %v1461, 1.442695
    %v1464 = vpow.pop %v1463
    %v1465 = vmul.f32 %v1462, 1.442695
    %v1466 = vpow.pop %v1465
    %v1467 = vadd.f32 %v1464, 1.0
    %v1468 = vadd.f32 %v1466, 1.0
    %v1469 = vrcp.pop %v1467
    %v1470 = vmul.f32 1.0, %v1469
    %v1471 = vrcp.pop %v1468
    %v1472 = vmul.f32 1.0, %v1471
    %v1473 = vtanh.pop %v1457
    %v1474 = vtanh.pop %v1459
    %v1475 = vmul.f32 %v1470, %v1352
    %1477 = vrot.lane.b32.xlu0 %v1473, 64
    %v1478 = vpop.permute.xlu0 %1477
    %v1480 = vmul.f32 %v1470, %v1478
    %1482 = vrot.lane.b32.xlu0 %v1480, 32
    %v1483 = vpop.permute.xlu0 %1482
    %v1485 = vadd.f32 %v1475, %v1483
    %v1486 = vtanh.pop %v1485
    %1488 = vrot.lane.b32.xlu0 %v1486, 64
    %v1489 = vpop.permute.xlu0 %1488
    %v1491 = vmul.f32 %v1470, %v1489
    %v1492 = vmul.f32 %v1472, %v1369
    %1494 = vrot.lane.b32.xlu0 %v1474, 64
    %v1495 = vpop.permute.xlu0 %1494
    %v1497 = vmul.f32 %v1472, %v1495
    %1499 = vrot.lane.b32.xlu0 %v1497, 32
    %v1500 = vpop.permute.xlu0 %1499
    %v1502 = vadd.f32 %v1492, %v1500
    %v1503 = vtanh.pop %v1502
    %1505 = vrot.lane.b32.xlu0 %v1503, 64
    %v1506 = vpop.permute.xlu0 %1505
    %v1508 = vmul.f32 %v1472, %v1506
    %1510 = vrot.lane.b32.xlu0 %v1491, 32
    %v1511 = vpop.permute.xlu0 %1510
    %1513 = vst.msk [vmem:[#allocation3] sm:$0xff] %vm357, %v580
    %1514 = vst.msk [vmem:[#allocation3 + $0x8] sm:$0xff] %vm357, %v713
    %1515 = vst.msk [vmem:[#allocation3 + $0x10] sm:$0xff] %vm357, %v846
    %1516 = vst.msk [vmem:[#allocation3 + $0x18] sm:$0xff] %vm357, %v979
    %1517 = vst.msk [vmem:[#allocation3 + $0x20] sm:$0xff] %vm357, %v1112
    %1518 = vst.msk [vmem:[#allocation3 + $0x28] sm:$0xff] %vm357, %v1245
    %1519 = vst.msk [vmem:[#allocation3 + $0x30] sm:$0xff] %vm357, %v1378
    %1520 = vst.msk [vmem:[#allocation3 + $0x38] sm:$0xff] %vm357, %v1511
    %1522 = vrot.lane.b32.xlu0 %v1508, 64
    %v1523 = vpop.permute.xlu0 %1522
    %vm1525 = vcmask 523520
    %1526 = vst.msk [vmem:[#allocation3] sm:$0xff] %vm1525, %v1523
    %1527 = vst.msk [vmem:[#allocation3 + $0x8] sm:$0xff] %vm1525, %v1382
    %1528 = vst.msk [vmem:[#allocation3 + $0x10] sm:$0xff] %vm1525, %v1249
    %1529 = vst.msk [vmem:[#allocation3 + $0x18] sm:$0xff] %vm1525, %v1116
    %1530 = vst.msk [vmem:[#allocation3 + $0x20] sm:$0xff] %vm1525, %v983
    %1531 = vst.msk [vmem:[#allocation3 + $0x28] sm:$0xff] %vm1525, %v850
    %1532 = vst.msk [vmem:[#allocation3 + $0x30] sm:$0xff] %vm1525, %v717
    %1533 = vst.msk [vmem:[#allocation3 + $0x38] sm:$0xff] %vm1525, %v584
    %v1534 = vsel %vm357, %v1511, %v1485
    %1535 = vst.msk [vmem:[%s13] sm:$0xff] %vm455, %v1534
    %1536 = vrot.lane.b32.xlu0 %v1508, 32
    %v1537 = vpop.permute.xlu0 %1536
    %v1539 = vsel %vm357, %v1537, %v1502
    %s1540 = scalar_lea.vmem %s13, 8
    %1541 = vst.msk [vmem:[%s1540] sm:$0xff] %vm455, %v1539
    %v1542 = vld [vmem:[#allocation3] sm:$0xff]
    %v1543 = vld [vmem:[#allocation3 + $0x8] sm:$0xff]
    %v1544 = vld [vmem:[#allocation3 + $0x10] sm:$0xff]
    %v1545 = vld [vmem:[#allocation3 + $0x18] sm:$0xff]
    %v1546 = vld [vmem:[#allocation3 + $0x20] sm:$0xff]
    %v1547 = vld [vmem:[#allocation3 + $0x28] sm:$0xff]
    %v1548 = vld [vmem:[#allocation3 + $0x30] sm:$0xff]
    %v1549 = vld [vmem:[#allocation3 + $0x38] sm:$0xff]
    %v1550 = vld [vmem:[#allocation7] sm:$0xff]
    %v1551 = vld [vmem:[#allocation7 + $0x8] sm:$0xff]
    %v1552 = vld [vmem:[#allocation7 + $0x10] sm:$0xff]
    %v1553 = vld [vmem:[#allocation7 + $0x18] sm:$0xff]
    %v1554 = vld [vmem:[#allocation7 + $0x20] sm:$0xff]
    %v1555 = vld [vmem:[#allocation7 + $0x28] sm:$0xff]
    %v1556 = vld [vmem:[#allocation7 + $0x30] sm:$0xff]
    %v1557 = vld [vmem:[#allocation7 + $0x38] sm:$0xff]
    %v1558 = vld [vmem:[#allocation7 + $0x40] sm:$0xff]
    %v1559 = vld [vmem:[#allocation7 + $0x48] sm:$0xff]
    %v1560 = vld [vmem:[#allocation7 + $0x50] sm:$0xff]
    %v1561 = vld [vmem:[#allocation7 + $0x58] sm:$0xff]
    %v1562 = vld [vmem:[%s5] sm:$0x1]
    %v1564 = vlaneseq
    %v1565 = vshrl.u32 %v1564, 7
    %v1566 = vsub.s32 0, %v1565
    %v1567 = vrot.slane %v1562, %v1566
    %vm1569 = vcmask 785408
    %v1571 = vsel %vm1569, %v1542, 0
    %v1574 = vsel %vm1569, %v1543, 0
    %v1577 = vsel %vm1569, %v1544, 0
    %v1580 = vsel %vm1569, %v1545, 0
    %v1583 = vsel %vm1569, %v1546, 0
    %v1586 = vsel %vm1569, %v1547, 0
    %v1589 = vsel %vm1569, %v1548, 0
    %v1592 = vsel %vm1569, %v1549, 0
    %1594 = vmatprep.subr.mxu0 0.0
    %1595 = vmatpush1.msra.mxu0 0.0
    %1596 = vmatprep.subr.mxu0 0.0
    %1597 = vmatpush1.msra.mxu0 0.0
    %1598 = vmatprep.subr.mxu0 0.0
    %1599 = vmatpush1.msra.mxu0 0.0
    %1600 = vmatprep.subr.mxu0 0.0
    %1601 = vmatpush1.msra.mxu0 0.0
    %1602 = vmatprep.subr.mxu0 0.0
    %1603 = vmatpush1.msra.mxu0 %v1561
    %1604 = vmatprep.subr.mxu0 0.0
    %1605 = vmatpush1.msra.mxu0 %v1560
    %1606 = vmatprep.subr.mxu0 0.0
    %1607 = vmatpush1.msra.mxu0 %v1559
    %1608 = vmatprep.subr.mxu0 0.0
    %1609 = vmatpush1.msra.mxu0 %v1558
    %1610 = vmatprep.subr.mxu0 0.0
    %1611 = vmatpush1.msra.mxu0 %v1557
    %1612 = vmatprep.subr.mxu0 0.0
    %1613 = vmatpush1.msra.mxu0 %v1556
    %1614 = vmatprep.subr.mxu0 0.0
    %1615 = vmatpush1.msra.mxu0 %v1555
    %1616 = vmatprep.subr.mxu0 0.0
    %1617 = vmatpush1.msra.mxu0 %v1554
    %1618 = vmatprep.subr.mxu0 0.0
    %1619 = vmatpush1.msra.mxu0 %v1553
    %1620 = vmatprep.subr.mxu0 0.0
    %1621 = vmatpush1.msra.mxu0 %v1552
    %1622 = vmatprep.subr.mxu0 0.0
    %1623 = vmatpush1.msra.mxu0 %v1551
    %1624 = vmatprep.subr.mxu0 0.0
    %1625 = vmatpush1.msra.mxu0 %v1550
    %1626 = vmatprep.subr.mxu0 0.0
    %1627 = vmatpush2.msra.mxu0 0.0
    %1628 = vmatprep.subr.mxu0 0.0
    %1629 = vmatpush2.msra.mxu0 0.0
    %1630 = vmatprep.subr.mxu0 0.0
    %1631 = vmatpush2.msra.mxu0 0.0
    %1632 = vmatprep.subr.mxu0 0.0
    %1633 = vmatpush2.msra.mxu0 0.0
    %1634 = vmatprep.subr.mxu0 0.0
    %1635 = vmatpush2.msra.mxu0 0.0
    %1636 = vmatprep.subr.mxu0 0.0
    %1637 = vmatpush2.msra.mxu0 0.0
    %1638 = vmatprep.subr.mxu0 0.0
    %1639 = vmatpush2.msra.mxu0 0.0
    %1640 = vmatprep.subr.mxu0 0.0
    %1641 = vmatpush2.msra.mxu0 0.0
    %1642 = vmatprep.subr.mxu0 0.0
    %1643 = vmatpush2.msra.mxu0 0.0
    %1644 = vmatprep.subr.mxu0 0.0
    %1645 = vmatpush2.msra.mxu0 0.0
    %1646 = vmatprep.subr.mxu0 0.0
    %1647 = vmatpush2.msra.mxu0 0.0
    %1648 = vmatprep.subr.mxu0 0.0
    %1649 = vmatpush2.msra.mxu0 0.0
    %1650 = vmatprep.subr.mxu0 0.0
    %1651 = vmatpush2.msra.mxu0 0.0
    %1652 = vmatprep.subr.mxu0 0.0
    %1653 = vmatpush2.msra.mxu0 0.0
    %1654 = vmatprep.subr.mxu0 0.0
    %1655 = vmatpush2.msra.mxu0 0.0
    %1656 = vmatprep.subr.mxu0 0.0
    %1657 = vmatpush2.msra.mxu0 0.0
    %1658 = vmatprep.mubr.f32.mxu0 0.0
    %1659 = vmatmul.mubr.f32.gmra.mxu0 %v1571
    %v1660 = vpop.f32.mrf.mxu0
    %v1661 = vadd.f32 %v1567, %v1660
    %v1662 = vpop.f32.mrf.mxu0
    %1663 = vmatprep.mubr.f32.mxu0 0.0
    %1664 = vmatmul.mubr.f32.gmra.mxu0 %v1574
    %v1665 = vpop.f32.mrf.mxu0
    %v1666 = vadd.f32 %v1567, %v1665
    %v1667 = vpop.f32.mrf.mxu0
    %1668 = vmatprep.mubr.f32.mxu0 0.0
    %1669 = vmatmul.mubr.f32.gmra.mxu0 %v1577
    %v1670 = vpop.f32.mrf.mxu0
    %v1671 = vadd.f32 %v1567, %v1670
    %v1672 = vpop.f32.mrf.mxu0
    %1673 = vmatprep.mubr.f32.mxu0 0.0
    %1674 = vmatmul.mubr.f32.gmra.mxu0 %v1580
    %v1675 = vpop.f32.mrf.mxu0
    %v1676 = vadd.f32 %v1567, %v1675
    %v1677 = vpop.f32.mrf.mxu0
    %1678 = vmatprep.mubr.f32.mxu0 0.0
    %1679 = vmatmul.mubr.f32.gmra.mxu0 %v1583
    %v1680 = vpop.f32.mrf.mxu0
    %v1681 = vadd.f32 %v1567, %v1680
    %v1682 = vpop.f32.mrf.mxu0
    %1683 = vmatprep.mubr.f32.mxu0 0.0
    %1684 = vmatmul.mubr.f32.gmra.mxu0 %v1586
    %v1685 = vpop.f32.mrf.mxu0
    %v1686 = vadd.f32 %v1567, %v1685
    %v1687 = vpop.f32.mrf.mxu0
    %1688 = vmatprep.mubr.f32.mxu0 0.0
    %1689 = vmatmul.mubr.f32.gmra.mxu0 %v1589
    %v1690 = vpop.f32.mrf.mxu0
    %v1691 = vadd.f32 %v1567, %v1690
    %v1692 = vpop.f32.mrf.mxu0
    %1693 = vmatprep.mubr.f32.mxu0 0.0
    %1694 = vmatmul.mubr.f32.gmra.mxu0 %v1592
    %v1695 = vpop.f32.mrf.mxu0
    %v1696 = vadd.f32 %v1567, %v1695
    %v1697 = vpop.f32.mrf.mxu0
    %1698 = vdwg.mxu0
    %v1699 = vmax.f32 %v1661, 0.0
    %v1700 = vmax.f32 %v1666, 0.0
    %v1701 = vmax.f32 %v1671, 0.0
    %v1702 = vmax.f32 %v1676, 0.0
    %v1703 = vmax.f32 %v1681, 0.0
    %v1704 = vmax.f32 %v1686, 0.0
    %v1705 = vmax.f32 %v1691, 0.0
    %v1706 = vmax.f32 %v1696, 0.0
    %1707 = vadd.xlane.f32.xlu0 %v1699
    %v1708 = vpop.xlane.xlu0 %1707
    %1709 = vadd.xlane.f32.xlu0 %v1700
    %v1710 = vpop.xlane.xlu0 %1709
    %1711 = vadd.xlane.f32.xlu0 %v1701
    %v1712 = vpop.xlane.xlu0 %1711
    %1713 = vadd.xlane.f32.xlu0 %v1702
    %v1714 = vpop.xlane.xlu0 %1713
    %1715 = vadd.xlane.f32.xlu0 %v1703
    %v1716 = vpop.xlane.xlu0 %1715
    %1717 = vadd.xlane.f32.xlu0 %v1704
    %v1718 = vpop.xlane.xlu0 %1717
    %1719 = vadd.xlane.f32.xlu0 %v1705
    %v1720 = vpop.xlane.xlu0 %1719
    %1721 = vadd.xlane.f32.xlu0 %v1706
    %v1722 = vpop.xlane.xlu0 %1721
    %v1723 = vrcp.pop 128.0
    %v1724 = vmul.f32 %v1708, %v1723
    %v1725 = vmul.f32 %v1710, %v1723
    %v1726 = vmul.f32 %v1712, %v1723
    %v1727 = vmul.f32 %v1714, %v1723
    %v1728 = vmul.f32 %v1716, %v1723
    %v1729 = vmul.f32 %v1718, %v1723
    %v1730 = vmul.f32 %v1720, %v1723
    %v1731 = vmul.f32 %v1722, %v1723
    %v1732 = vsub.f32 %v1699, %v1724
    %v1733 = vsub.f32 %v1700, %v1725
    %v1734 = vsub.f32 %v1701, %v1726
    %v1735 = vsub.f32 %v1702, %v1727
    %v1736 = vsub.f32 %v1703, %v1728
    %v1737 = vsub.f32 %v1704, %v1729
    %v1738 = vsub.f32 %v1705, %v1730
    %v1739 = vsub.f32 %v1706, %v1731
    %v1740 = vmul.f32 %v1732, %v1732
    %v1741 = vmul.f32 %v1733, %v1733
    %v1742 = vmul.f32 %v1734, %v1734
    %v1743 = vmul.f32 %v1735, %v1735
    %v1744 = vmul.f32 %v1736, %v1736
    %v1745 = vmul.f32 %v1737, %v1737
    %v1746 = vmul.f32 %v1738, %v1738
    %v1747 = vmul.f32 %v1739, %v1739
    %1748 = vadd.xlane.f32.xlu0 %v1740
    %v1749 = vpop.xlane.xlu0 %1748
    %1750 = vadd.xlane.f32.xlu0 %v1741
    %v1751 = vpop.xlane.xlu0 %1750
    %1752 = vadd.xlane.f32.xlu0 %v1742
    %v1753 = vpop.xlane.xlu0 %1752
    %1754 = vadd.xlane.f32.xlu0 %v1743
    %v1755 = vpop.xlane.xlu0 %1754
    %1756 = vadd.xlane.f32.xlu0 %v1744
    %v1757 = vpop.xlane.xlu0 %1756
    %1758 = vadd.xlane.f32.xlu0 %v1745
    %v1759 = vpop.xlane.xlu0 %1758
    %1760 = vadd.xlane.f32.xlu0 %v1746
    %v1761 = vpop.xlane.xlu0 %1760
    %1762 = vadd.xlane.f32.xlu0 %v1747
    %v1763 = vpop.xlane.xlu0 %1762
    %v1764 = vmul.f32 %v1749, %v1723
    %v1765 = vmul.f32 %v1751, %v1723
    %v1766 = vmul.f32 %v1753, %v1723
    %v1767 = vmul.f32 %v1755, %v1723
    %v1768 = vmul.f32 %v1757, %v1723
    %v1769 = vmul.f32 %v1759, %v1723
    %v1770 = vmul.f32 %v1761, %v1723
    %v1771 = vmul.f32 %v1763, %v1723
    %v1772 = vadd.f32 %v1764, 1e-05
    %v1773 = vadd.f32 %v1765, 1e-05
    %v1774 = vadd.f32 %v1766, 1e-05
    %v1775 = vadd.f32 %v1767, 1e-05
    %v1776 = vadd.f32 %v1768, 1e-05
    %v1777 = vadd.f32 %v1769, 1e-05
    %v1778 = vadd.f32 %v1770, 1e-05
    %v1779 = vadd.f32 %v1771, 1e-05
    %v1780 = vrsqrt.pop %v1772
    %v1781 = vrsqrt.pop %v1773
    %v1782 = vrsqrt.pop %v1774
    %v1783 = vrsqrt.pop %v1775
    %v1784 = vrsqrt.pop %v1776
    %v1785 = vrsqrt.pop %v1777
    %v1786 = vrsqrt.pop %v1778
    %v1787 = vrsqrt.pop %v1779
    %v1788 = vmul.f32 %v1732, %v1780
    %v1789 = vmul.f32 %v1733, %v1781
    %v1790 = vmul.f32 %v1734, %v1782
    %v1791 = vmul.f32 %v1735, %v1783
    %v1792 = vmul.f32 %v1736, %v1784
    %v1793 = vmul.f32 %v1737, %v1785
    %v1794 = vmul.f32 %v1738, %v1786
    %v1795 = vmul.f32 %v1739, %v1787
    %v1796 = vld [vmem:[%s6] sm:$0x1]
    %v1798 = vlaneseq
    %v1799 = vshrl.u32 %v1798, 7
    %v1800 = vsub.s32 0, %v1799
    %v1801 = vrot.slane %v1796, %v1800
    %v1803 = vmul.f32 %v1788, %v1801
    %v1804 = vmul.f32 %v1789, %v1801
    %v1805 = vmul.f32 %v1790, %v1801
    %v1806 = vmul.f32 %v1791, %v1801
    %v1807 = vmul.f32 %v1792, %v1801
    %v1808 = vmul.f32 %v1793, %v1801
    %v1809 = vmul.f32 %v1794, %v1801
    %v1810 = vmul.f32 %v1795, %v1801
    %v1811 = vld [vmem:[%s7] sm:$0x1]
    %v1813 = vlaneseq
    %v1814 = vshrl.u32 %v1813, 7
    %v1815 = vsub.s32 0, %v1814
    %v1816 = vrot.slane %v1811, %v1815
    %v1818 = vadd.f32 %v1803, %v1816
    %v1819 = vadd.f32 %v1804, %v1816
    %v1820 = vadd.f32 %v1805, %v1816
    %v1821 = vadd.f32 %v1806, %v1816
    %v1822 = vadd.f32 %v1807, %v1816
    %v1823 = vadd.f32 %v1808, %v1816
    %v1824 = vadd.f32 %v1809, %v1816
    %v1825 = vadd.f32 %v1810, %v1816
    %v1826 = vld [vmem:[#allocation9] sm:$0xff]
    %v1827 = vld [vmem:[#allocation9 + $0x8] sm:$0xff]
    %v1828 = vld [vmem:[#allocation9 + $0x10] sm:$0xff]
    %v1829 = vld [vmem:[#allocation9 + $0x18] sm:$0xff]
    %v1830 = vld [vmem:[#allocation9 + $0x20] sm:$0xff]
    %v1831 = vld [vmem:[#allocation9 + $0x28] sm:$0xff]
    %v1832 = vld [vmem:[#allocation9 + $0x30] sm:$0xff]
    %v1833 = vld [vmem:[#allocation9 + $0x38] sm:$0xff]
    %v1834 = vld [vmem:[#allocation9 + $0x40] sm:$0xff]
    %v1835 = vld [vmem:[#allocation9 + $0x48] sm:$0xff]
    %v1836 = vld [vmem:[#allocation9 + $0x50] sm:$0xff]
    %v1837 = vld [vmem:[#allocation9 + $0x58] sm:$0xff]
    %v1838 = vld [vmem:[#allocation9 + $0x60] sm:$0xff]
    %v1839 = vld [vmem:[#allocation9 + $0x68] sm:$0xff]
    %v1840 = vld [vmem:[#allocation9 + $0x70] sm:$0xff]
    %v1841 = vld [vmem:[#allocation9 + $0x78] sm:$0xff]
    %v1842 = vld [vmem:[%s9] sm:$0x1]
    %v1844 = vlaneseq
    %v1845 = vshrl.u32 %v1844, 7
    %v1846 = vsub.s32 0, %v1845
    %v1847 = vrot.slane %v1842, %v1846
    %1849 = vmatprep.subr.mxu0 0.0
    %1850 = vmatpush1.msra.mxu0 %v1841
    %1851 = vmatprep.subr.mxu0 0.0
    %1852 = vmatpush1.msra.mxu0 %v1840
    %1853 = vmatprep.subr.mxu0 0.0
    %1854 = vmatpush1.msra.mxu0 %v1839
    %1855 = vmatprep.subr.mxu0 0.0
    %1856 = vmatpush1.msra.mxu0 %v1838
    %1857 = vmatprep.subr.mxu0 0.0
    %1858 = vmatpush1.msra.mxu0 %v1837
    %1859 = vmatprep.subr.mxu0 0.0
    %1860 = vmatpush1.msra.mxu0 %v1836
    %1861 = vmatprep.subr.mxu0 0.0
    %1862 = vmatpush1.msra.mxu0 %v1835
    %1863 = vmatprep.subr.mxu0 0.0
    %1864 = vmatpush1.msra.mxu0 %v1834
    %1865 = vmatprep.subr.mxu0 0.0
    %1866 = vmatpush1.msra.mxu0 %v1833
    %1867 = vmatprep.subr.mxu0 0.0
    %1868 = vmatpush1.msra.mxu0 %v1832
    %1869 = vmatprep.subr.mxu0 0.0
    %1870 = vmatpush1.msra.mxu0 %v1831
    %1871 = vmatprep.subr.mxu0 0.0
    %1872 = vmatpush1.msra.mxu0 %v1830
    %1873 = vmatprep.subr.mxu0 0.0
    %1874 = vmatpush1.msra.mxu0 %v1829
    %1875 = vmatprep.subr.mxu0 0.0
    %1876 = vmatpush1.msra.mxu0 %v1828
    %1877 = vmatprep.subr.mxu0 0.0
    %1878 = vmatpush1.msra.mxu0 %v1827
    %1879 = vmatprep.subr.mxu0 0.0
    %1880 = vmatpush1.msra.mxu0 %v1826
    %1881 = vmatprep.subr.mxu0 0.0
    %1882 = vmatpush2.msra.mxu0 0.0
    %1883 = vmatprep.subr.mxu0 0.0
    %1884 = vmatpush2.msra.mxu0 0.0
    %1885 = vmatprep.subr.mxu0 0.0
    %1886 = vmatpush2.msra.mxu0 0.0
    %1887 = vmatprep.subr.mxu0 0.0
    %1888 = vmatpush2.msra.mxu0 0.0
    %1889 = vmatprep.subr.mxu0 0.0
    %1890 = vmatpush2.msra.mxu0 0.0
    %1891 = vmatprep.subr.mxu0 0.0
    %1892 = vmatpush2.msra.mxu0 0.0
    %1893 = vmatprep.subr.mxu0 0.0
    %1894 = vmatpush2.msra.mxu0 0.0
    %1895 = vmatprep.subr.mxu0 0.0
    %1896 = vmatpush2.msra.mxu0 0.0
    %1897 = vmatprep.subr.mxu0 0.0
    %1898 = vmatpush2.msra.mxu0 0.0
    %1899 = vmatprep.subr.mxu0 0.0
    %1900 = vmatpush2.msra.mxu0 0.0
    %1901 = vmatprep.subr.mxu0 0.0
    %1902 = vmatpush2.msra.mxu0 0.0
    %1903 = vmatprep.subr.mxu0 0.0
    %1904 = vmatpush2.msra.mxu0 0.0
    %1905 = vmatprep.subr.mxu0 0.0
    %1906 = vmatpush2.msra.mxu0 0.0
    %1907 = vmatprep.subr.mxu0 0.0
    %1908 = vmatpush2.msra.mxu0 0.0
    %1909 = vmatprep.subr.mxu0 0.0
    %1910 = vmatpush2.msra.mxu0 0.0
    %1911 = vmatprep.subr.mxu0 0.0
    %1912 = vmatpush2.msra.mxu0 0.0
    %1913 = vmatprep.mubr.f32.mxu0 0.0
    %1914 = vmatmul.mubr.f32.gmra.mxu0 %v1818
    %v1915 = vpop.f32.mrf.mxu0
    %v1916 = vadd.f32 %v1847, %v1915
    %v1917 = vpop.f32.mrf.mxu0
    %1918 = vmatprep.mubr.f32.mxu0 0.0
    %1919 = vmatmul.mubr.f32.gmra.mxu0 %v1819
    %v1920 = vpop.f32.mrf.mxu0
    %v1921 = vadd.f32 %v1847, %v1920
    %v1922 = vpop.f32.mrf.mxu0
    %1923 = vmatprep.mubr.f32.mxu0 0.0
    %1924 = vmatmul.mubr.f32.gmra.mxu0 %v1820
    %v1925 = vpop.f32.mrf.mxu0
    %v1926 = vadd.f32 %v1847, %v1925
    %v1927 = vpop.f32.mrf.mxu0
    %1928 = vmatprep.mubr.f32.mxu0 0.0
    %1929 = vmatmul.mubr.f32.gmra.mxu0 %v1821
    %v1930 = vpop.f32.mrf.mxu0
    %v1931 = vadd.f32 %v1847, %v1930
    %v1932 = vpop.f32.mrf.mxu0
    %1933 = vmatprep.mubr.f32.mxu0 0.0
    %1934 = vmatmul.mubr.f32.gmra.mxu0 %v1822
    %v1935 = vpop.f32.mrf.mxu0
    %v1936 = vadd.f32 %v1847, %v1935
    %v1937 = vpop.f32.mrf.mxu0
    %1938 = vmatprep.mubr.f32.mxu0 0.0
    %1939 = vmatmul.mubr.f32.gmra.mxu0 %v1823
    %v1940 = vpop.f32.mrf.mxu0
    %v1941 = vadd.f32 %v1847, %v1940
    %v1942 = vpop.f32.mrf.mxu0
    %1943 = vmatprep.mubr.f32.mxu0 0.0
    %1944 = vmatmul.mubr.f32.gmra.mxu0 %v1824
    %v1945 = vpop.f32.mrf.mxu0
    %v1946 = vadd.f32 %v1847, %v1945
    %v1947 = vpop.f32.mrf.mxu0
    %1948 = vmatprep.mubr.f32.mxu0 0.0
    %1949 = vmatmul.mubr.f32.gmra.mxu0 %v1825
    %v1950 = vpop.f32.mrf.mxu0
    %v1951 = vadd.f32 %v1847, %v1950
    %v1952 = vpop.f32.mrf.mxu0
    %1953 = vdwg.mxu0
    %v1954 = vmax.f32 %v1916, 0.0
    %v1955 = vmax.f32 %v1921, 0.0
    %v1956 = vmax.f32 %v1926, 0.0
    %v1957 = vmax.f32 %v1931, 0.0
    %v1958 = vmax.f32 %v1936, 0.0
    %v1959 = vmax.f32 %v1941, 0.0
    %v1960 = vmax.f32 %v1946, 0.0
    %v1961 = vmax.f32 %v1951, 0.0
    %v1962 = vld [vmem:[%s10] sm:$0x1]
    %v1963 = vld [vmem:[#allocation4] sm:$0x1]
    %1965 = vset.pattern.permute.xlu0 0
    %1966 = vperm.xlu0 %1965, %v1963
    %v1967 = vpop.permute.xlu0 %1966
    %v1969 = vlaneseq
    %v1970 = vshrl.u32 %v1969, 7
    %v1971 = vsub.s32 0, %v1970
    %v1972 = vrot.slane %v1967, %v1971
    %v1974 = vsel %vm455, %v1962, 0
    %v1977 = vsel %vm455, %v1954, 0
    %v1980 = vsel %vm455, %v1955, 0
    %v1983 = vsel %vm455, %v1956, 0
    %v1986 = vsel %vm455, %v1957, 0
    %v1989 = vsel %vm455, %v1958, 0
    %v1992 = vsel %vm455, %v1959, 0
    %v1995 = vsel %vm455, %v1960, 0
    %v1998 = vsel %vm455, %v1961, 0
    %2000 = vmatprep.subr.mxu0 0.0
    %2001 = vmatpush1.xpose.msra.mxu0 0.0
    %2002 = vmatprep.subr.mxu0 0.0
    %2003 = vmatpush1.xpose.msra.mxu0 0.0
    %2004 = vmatprep.subr.mxu0 0.0
    %2005 = vmatpush1.xpose.msra.mxu0 0.0
    %2006 = vmatprep.subr.mxu0 0.0
    %2007 = vmatpush1.xpose.msra.mxu0 0.0
    %2008 = vmatprep.subr.mxu0 0.0
    %2009 = vmatpush1.xpose.msra.mxu0 0.0
    %2010 = vmatprep.subr.mxu0 0.0
    %2011 = vmatpush1.xpose.msra.mxu0 0.0
    %2012 = vmatprep.subr.mxu0 0.0
    %2013 = vmatpush1.xpose.msra.mxu0 0.0
    %2014 = vmatprep.subr.mxu0 0.0
    %2015 = vmatpush1.xpose.msra.mxu0 0.0
    %2016 = vmatprep.subr.mxu0 0.0
    %2017 = vmatpush1.xpose.msra.mxu0 %v1998
    %2018 = vmatprep.subr.mxu0 0.0
    %2019 = vmatpush1.xpose.msra.mxu0 %v1995
    %2020 = vmatprep.subr.mxu0 0.0
    %2021 = vmatpush1.xpose.msra.mxu0 %v1992
    %2022 = vmatprep.subr.mxu0 0.0
    %2023 = vmatpush1.xpose.msra.mxu0 %v1989
    %2024 = vmatprep.subr.mxu0 0.0
    %2025 = vmatpush1.xpose.msra.mxu0 %v1986
    %2026 = vmatprep.subr.mxu0 0.0
    %2027 = vmatpush1.xpose.msra.mxu0 %v1983
    %2028 = vmatprep.subr.mxu0 0.0
    %2029 = vmatpush1.xpose.msra.mxu0 %v1980
    %2030 = vmatprep.subr.mxu0 0.0
    %2031 = vmatpush1.xpose.msra.mxu0 %v1977
    %2032 = vmatprep.subr.mxu0 0.0
    %2033 = vmatpush2.xpose.msra.mxu0 0.0
    %2034 = vmatprep.subr.mxu0 0.0
    %2035 = vmatpush2.xpose.msra.mxu0 0.0
    %2036 = vmatprep.subr.mxu0 0.0
    %2037 = vmatpush2.xpose.msra.mxu0 0.0
    %2038 = vmatprep.subr.mxu0 0.0
    %2039 = vmatpush2.xpose.msra.mxu0 0.0
    %2040 = vmatprep.subr.mxu0 0.0
    %2041 = vmatpush2.xpose.msra.mxu0 0.0
    %2042 = vmatprep.subr.mxu0 0.0
    %2043 = vmatpush2.xpose.msra.mxu0 0.0
    %2044 = vmatprep.subr.mxu0 0.0
    %2045 = vmatpush2.xpose.msra.mxu0 0.0
    %2046 = vmatprep.subr.mxu0 0.0
    %2047 = vmatpush2.xpose.msra.mxu0 0.0
    %2048 = vmatprep.subr.mxu0 0.0
    %2049 = vmatpush2.xpose.msra.mxu0 0.0
    %2050 = vmatprep.subr.mxu0 0.0
    %2051 = vmatpush2.xpose.msra.mxu0 0.0
    %2052 = vmatprep.subr.mxu0 0.0
    %2053 = vmatpush2.xpose.msra.mxu0 0.0
    %2054 = vmatprep.subr.mxu0 0.0
    %2055 = vmatpush2.xpose.msra.mxu0 0.0
    %2056 = vmatprep.subr.mxu0 0.0
    %2057 = vmatpush2.xpose.msra.mxu0 0.0
    %2058 = vmatprep.subr.mxu0 0.0
    %2059 = vmatpush2.xpose.msra.mxu0 0.0
    %2060 = vmatprep.subr.mxu0 0.0
    %2061 = vmatpush2.xpose.msra.mxu0 0.0
    %2062 = vmatprep.subr.mxu0 0.0
    %2063 = vmatpush2.xpose.msra.mxu0 0.0
    %2064 = vmatprep.mubr.f32.mxu0 0.0
    %2065 = vmatmul.mubr.f32.gmra.mxu0 %v1974
    %v2066 = vpop.f32.mrf.mxu0
    %v2067 = vadd.f32 %v1972, %v2066
    %v2068 = vpop.f32.mrf.mxu0
    %2069 = vdwg.mxu0
    %vm2070 = vcmask 516096
    %2071 = vst.msk [vmem:[%s12] sm:$0x1] %vm2070, %v2067
    // Predicated region
    $region62: #{_lambda_.1} parent=1 // pred_check
      _
    $region63: #{_lambda_.1} parent=1 // pred_check_branch
      %2073 = sbr.rel (0) target = $region65
    $region64: #{_lambda_.1} parent=1 // pred_region
      _
    $region65: #{_lambda_.1} parent=1 // pred_fallthru
      _
    // Predicated region
    $region66: #{_lambda_.1} parent=1 // pred_check
      _
    $region67: #{_lambda_.1} parent=1 // pred_check_branch
      %2075 = sbr.rel (0) target = $region69
    $region68: #{_lambda_.1} parent=1 // pred_region
      _
    $region69: #{_lambda_.1} parent=1 // pred_fallthru
      _
    // Predicated region
    $region70: #{_lambda_.1} parent=1 // pred_check
      _
    $region71: #{_lambda_.1} parent=1 // pred_check_branch
      %2077 = sbr.rel (0) target = $region73
    $region72: #{_lambda_.1} parent=1 // pred_region
      _
    $region73: #{_lambda_.1} parent=1 // pred_fallthru
      _
    // Predicated region
    $region74: #{_lambda_.1} parent=1 // pred_check
      _
    $region75: #{_lambda_.1} parent=1 // pred_check_branch
      %2079 = sbr.rel (0) target = $region77
    $region76: #{_lambda_.1} parent=1 // pred_region
      _
    $region77: #{_lambda_.1} parent=1 // pred_fallthru
      _
    %2080 = vsyncpa [#allocation6], 1
    %2081 = vsyncpa [#allocation8], 1

</llo_original>
